<compile_context>
chip_gen: v5e
topology: v5e:2x2
jax: 0.10.0
libtpu: 0.0.40
codegen_flags: <defaults>
</compile_context>

<pallas_src>
import numpy as np
import jax
import jax.numpy as jnp
from jax import lax
from jax.experimental import pallas as pl
from jax.experimental.pallas import tpu as pltpu


# -----------------------------------------------------------------------------
# Parameter init (deterministic, synthetic)
# -----------------------------------------------------------------------------
def init_params(key, cfg):
    out_c = cfg["out_channels"]
    res_c = cfg["residual_channels"]
    gate_c = cfg["gate_channels"]
    skip_c = cfg["skip_out_channels"]
    feat_c = cfg["feature_channels"]
    K = cfg["kernel_size"]
    L = cfg["layers"]
    aux = cfg["aux_context_window"]

    ks = jax.random.split(key, 14)

    def w(k, shape, fan_in):
        return (jax.random.normal(k, shape, jnp.float32) / np.sqrt(fan_in)).astype(
            jnp.float32
        )

    p = {}
    # first_conv: Conv1d(out_channels -> residual_channels, k=1)
    p["first_w"] = w(ks[0], (res_c, out_c), out_c)
    p["first_b"] = w(ks[1], (res_c, 1), out_c)
    # per-layer ResSkipBlock params (stacked along leading L axis)
    p["conv_w"] = w(ks[2], (L, K, gate_c, res_c), res_c * K)   # dilated conv
    p["conv_b"] = w(ks[3], (L, gate_c, 1), res_c * K)
    p["cond_w"] = w(ks[4], (L, gate_c, feat_c), feat_c)        # conv1x1c (no bias)
    p["out_w"] = w(ks[5], (L, res_c, gate_c // 2), gate_c // 2)
    p["out_b"] = w(ks[6], (L, res_c, 1), gate_c // 2)
    p["skip_w"] = w(ks[7], (L, skip_c, gate_c // 2), gate_c // 2)
    p["skip_b"] = w(ks[8], (L, skip_c, 1), gate_c // 2)
    # last_conv_layers: ReLU -> Conv1d(skip, skip, 1) -> ReLU -> Conv1d(skip, out, 1)
    p["last_w1"] = w(ks[9], (skip_c, skip_c), skip_c)
    p["last_b1"] = w(ks[10], (skip_c, 1), skip_c)
    p["last_w2"] = w(ks[11], (out_c, skip_c), skip_c)
    p["last_b2"] = w(ks[12], (out_c, 1), skip_c)
    # ConvInUpsampleNetwork.conv_in: Conv1d(feat, feat, 2*aux+1, bias=False)
    p["conv_in_w"] = w(ks[13], (feat_c, feat_c, 2 * aux + 1), feat_c * (2 * aux + 1))
    return p


# -----------------------------------------------------------------------------
# ConvInUpsampleNetwork — plain JAX glue (preprocessing of conditioning features)
# TODO(synk): upsample_net kept in plain JAX glue; could be fused into a second
# Pallas kernel if it ever became a hot path.
# -----------------------------------------------------------------------------
def upsample_net(feature, params, cfg):
    # valid Conv1d, no bias
    c = lax.conv_general_dilated(
        feature,
        params["conv_in_w"],
        window_strides=(1,),
        padding="VALID",
        dimension_numbers=("NCH", "OIH", "NCH"),
    )
    for scale in cfg["upsample_scales"]:
        # F.interpolate(mode="nearest", scale_factor=scale) along time
        c = jnp.repeat(c, scale, axis=-1)
        # Conv2d(1, 1, (1, 2*scale+1), padding=(0, scale), bias=False),
        # weights filled with 1/k  ->  per-(B, C) moving average along time.
        k = 2 * scale + 1
        wavg = jnp.full((1, 1, k), 1.0 / k, jnp.float32)
        B, C, T = c.shape
        c = lax.conv_general_dilated(
            c.reshape(B * C, 1, T),
            wavg,
            (1,),
            [(scale, scale)],
            dimension_numbers=("NCH", "OIH", "NCH"),
        ).reshape(B, C, T)
    return c


# -----------------------------------------------------------------------------
# The Pallas kernel: L gated residual/skip blocks -> head (first conv is a
# gather done in the wrapper).  All activations are (channels, B*T).
# -----------------------------------------------------------------------------
def make_kernel(cfg, dilations, T_per_batch):
    L = cfg["layers"]
    K = cfg["kernel_size"]
    res_c = cfg["residual_channels"]
    gate_c = cfg["gate_channels"]
    skip_c = cfg["skip_out_channels"]
    half = gate_c // 2
    # distinct causal shifts used by any layer (for hoisted mask precompute)
    shifts = sorted(
        {(K - 1 - k) * d for d in set(dilations) for k in range(K) if (K - 1 - k) * d > 0}
    )

    def kernel(
        h0_ref, feat_ref,
        cw_ref, condw_ref, convb_ref,
        sow_ref, ob_ref, sbsum_ref,
        w1_ref, b1_ref, w2_ref, b2_ref,
        o_ref,
    ):
        h = h0_ref[...]               # (res_c, B*T) f32 residual stream
        BT = h.shape[-1]

        # Hoisted conditioning for all layers at once, dilated-conv biases folded in.
        cond_all = (
            jnp.dot(condw_ref[...], feat_ref[...], preferred_element_type=jnp.float32)
            + convb_ref[...]
        )                              # (L*gate_c, B*T)

        # Causal masks per distinct shift.  Batch is folded into lanes, so use
        # the *local* time index t mod T (prevents cross-batch leakage of roll).
        t_local = lax.broadcasted_iota(jnp.int32, (res_c, BT), 1) % T_per_batch
        masks = {s: t_local >= s for s in shifts}

        skips = jnp.zeros((skip_c, BT), jnp.float32)
        # TODO(synk): for real depths (L=24-30) switch this unrolled loop to a
        # lax.fori_loop with dynamic indexing into the stacked weight refs.
        for l in range(L):
            d = dilations[l]
            h_bf = h.astype(jnp.bfloat16)
            # Stack the K time-shifted copies along sublanes -> one fused matmul.
            taps = []
            for k in range(K):
                s = (K - 1 - k) * d
                if s == 0:
                    taps.append(h_bf)
                else:
                    taps.append(
                        jnp.where(masks[s], pltpu.roll(h, s, axis=1), 0.0)
                        .astype(jnp.bfloat16)
                    )
            stacked = jnp.concatenate(taps, axis=0) if len(taps) > 1 else taps[0]

            # fused dilated causal conv (all K taps in one MXU matmul)
            z = jnp.dot(cw_ref[l], stacked, preferred_element_type=jnp.float32)
            z = z + cond_all[l * gate_c:(l + 1) * gate_c]

            # gated activation
            g = (jnp.tanh(z[:half]) * jax.nn.sigmoid(z[half:])).astype(jnp.bfloat16)

            # fused skip + residual 1x1 convs (single matmul, slice the result)
            so = jnp.dot(sow_ref[l], g, preferred_element_type=jnp.float32)
            skips = skips + so[:skip_c]
            h = so[skip_c:] + ob_ref[l] + h

        # last_conv_layers: ReLU -> 1x1 -> ReLU -> 1x1
        out = jnp.maximum(skips + sbsum_ref[...], 0.0)
        out = (
            jnp.dot(w1_ref[...], out.astype(jnp.bfloat16),
                    preferred_element_type=jnp.float32)
            + b1_ref[...]
        )
        out = jnp.maximum(out, 0.0)
        out = (
            jnp.dot(w2_ref[...], out.astype(jnp.bfloat16),
                    preferred_element_type=jnp.float32)
            + b2_ref[...]
        )
        o_ref[...] = out

    return kernel


# -----------------------------------------------------------------------------
# Wrapper: preprocessing (glue) + pallas_call
# -----------------------------------------------------------------------------
def wavenet_forward(x, feature, params, cfg):
    B, T = x.shape
    out_c = cfg["out_channels"]
    res_c = cfg["residual_channels"]
    gate_c = cfg["gate_channels"]
    feat_c = cfg["feature_channels"]
    K = cfg["kernel_size"]
    L = cfg["layers"]
    layers_per_stack = L // cfg["stacks"]
    dilations = tuple(2 ** (l % layers_per_stack) for l in range(L))
    BT = B * T
    bf = jnp.bfloat16

    # --- plain-JAX glue ------------------------------------------------------
    # teacher-forcing shift: F.pad(x, (1, 0))[:, :-1]
    x_prev = jnp.concatenate([jnp.zeros((B, 1), x.dtype), x[:, :-1]], axis=1)
    # first 1x1 conv on a one-hot == embedding gather (exact, no dense one-hot)
    h0 = jnp.take(params["first_w"], x_prev.reshape(-1), axis=1) + params["first_b"]
    # aux feature upsampling, then fold batch into lanes: (feat_c, B*T)
    feat_up = upsample_net(feature, params, cfg)        # (B, feat_c, T)
    assert feat_up.shape[-1] == T
    feat_flat = jnp.transpose(feat_up, (1, 0, 2)).reshape(feat_c, BT).astype(bf)

    # --- weight prep: fuse / flatten / cast to bf16 ---------------------------
    # dilated conv: (L, K, gate_c, res_c) -> (L, gate_c, K*res_c)
    cw_fused = (
        jnp.transpose(params["conv_w"], (0, 2, 1, 3)).reshape(L, gate_c, K * res_c)
    ).astype(bf)
    # conditioning conv, hoisted over layers: (L*gate_c, feat_c); biases folded
    condw_flat = params["cond_w"].reshape(L * gate_c, feat_c).astype(bf)
    convb_flat = params["conv_b"].reshape(L * gate_c, 1)
    # fused skip + residual 1x1 convs: (L, skip_c + res_c, gate_c//2)
    sow_fused = jnp.concatenate([params["skip_w"], params["out_w"]], axis=1).astype(bf)
    out_b = params["out_b"]
    skip_b_sum = jnp.sum(params["skip_b"], axis=0)      # (skip_c, 1), added once
    w1 = params["last_w1"].astype(bf)
    b1 = params["last_b1"]
    w2 = params["last_w2"].astype(bf)
    b2 = params["last_b2"]

    kernel = make_kernel(cfg, dilations, T)
    inputs = (
        h0, feat_flat,
        cw_fused, condw_flat, convb_flat,
        sow_fused, out_b, skip_b_sum,
        w1, b1, w2, b2,
    )
    vmem = pltpu.MemorySpace.VMEM
    out_flat = pl.pallas_call(
        kernel,
        out_shape=jax.ShapeDtypeStruct((out_c, BT), jnp.float32),
        in_specs=[pl.BlockSpec(memory_space=vmem)] * len(inputs),
        out_specs=pl.BlockSpec(memory_space=vmem),
        compiler_params=pltpu.CompilerParams(vmem_limit_bytes=64 * 1024 * 1024),
    )(*inputs)

    # (out_c, B*T) -> (B, out_c, T)
    return jnp.transpose(out_flat.reshape(out_c, B, T), (1, 0, 2))


# -----------------------------------------------------------------------------
# Pure-JAX reference of the same forward pass (for correctness check)
# -----------------------------------------------------------------------------
def wavenet_ref(x, feature, params, cfg):
    B, T = x.shape
    out_c = cfg["out_channels"]
    L = cfg["layers"]
    K = cfg["kernel_size"]
    layers_per_stack = L // cfg["stacks"]
    dilations = [2 ** (l % layers_per_stack) for l in range(L)]
    half = cfg["gate_channels"] // 2

    x_prev = jnp.concatenate([jnp.zeros((B, 1), x.dtype), x[:, :-1]], axis=1)
    xo = jax.nn.one_hot(x_prev, out_c, axis=1, dtype=jnp.float32)
    feat = upsample_net(feature, params, cfg)

    h = jnp.einsum("rc,bct->brt", params["first_w"], xo) + params["first_b"][None]
    skips = jnp.zeros((B, cfg["skip_out_channels"], T), jnp.float32)
    for l in range(L):
        d = dilations[l]
        acc = jnp.zeros((B, cfg["gate_channels"], T), jnp.float32)
        for k in range(K):
            s = (K - 1 - k) * d
            hs = h if s == 0 else jnp.pad(h, ((0, 0), (0, 0), (s, 0)))[:, :, :T]
            acc = acc + jnp.einsum("gr,brt->bgt", params["conv_w"][l, k], hs)
        z = acc + params["conv_b"][l][None]
        z = z + jnp.einsum("gf,bft->bgt", params["cond_w"][l], feat)
        a, b = z[:, :half], z[:, half:]
        g = jnp.tanh(a) * jax.nn.sigmoid(b)
        skips = (
            skips
            + jnp.einsum("sg,bgt->bst", params["skip_w"][l], g)
            + params["skip_b"][l][None]
        )
        h = (
            jnp.einsum("rg,bgt->brt", params["out_w"][l], g)
            + params["out_b"][l][None]
            + h
        )
    out = jnp.maximum(skips, 0.0)
    out = jnp.einsum("os,bst->bot", params["last_w1"], out) + params["last_b1"][None]
    out = jnp.maximum(out, 0.0)
    out = jnp.einsum("os,bst->bot", params["last_w2"], out) + params["last_b2"][None]
    return out


if __name__ == "__main__":
    cfg = dict(
        out_channels=32,
        layers=4,
        stacks=2,
        residual_channels=16,
        gate_channels=32,
        skip_out_channels=16,
        kernel_size=2,
        feature_channels=8,
        upsample_scales=(2, 2),
        aux_context_window=2,
    )
    B = 2
    T_frames = 36
    T = (T_frames - 2 * cfg["aux_context_window"]) * int(
        np.prod(cfg["upsample_scales"])
    )  # = 128

    key = jax.random.PRNGKey(0)
    k_p, k_x, k_f = jax.random.split(key, 3)
    params = init_params(k_p, cfg)
    x = jax.random.randint(k_x, (B, T), 0, cfg["out_channels"], dtype=jnp.int32)
    feature = jax.random.normal(
        k_f, (B, cfg["feature_channels"], T_frames), jnp.float32
    )

    out = jax.block_until_ready(wavenet_forward(x, feature, params, cfg))
    ref = jax.block_until_ready(wavenet_ref(x, feature, params, cfg))

    assert out.shape == (B, cfg["out_channels"], T)
    np.testing.assert_allclose(np.asarray(out), np.asarray(ref), rtol=5e-2, atol=5e-2)
    print("KERNEL_OK")
</pallas_src>

<mosaic_0001>
module attributes {stable_mosaic.version = 11 : i64} {
  func.func @kernel(%arg0: memref<16x256xf32, #tpu.memory_space<vmem>>, %arg1: memref<8x256xbf16, #tpu.memory_space<vmem>>, %arg2: memref<4x32x32xbf16, #tpu.memory_space<vmem>>, %arg3: memref<128x8xbf16, #tpu.memory_space<vmem>>, %arg4: memref<128x1xf32, #tpu.memory_space<vmem>>, %arg5: memref<4x32x16xbf16, #tpu.memory_space<vmem>>, %arg6: memref<4x16x1xf32, #tpu.memory_space<vmem>>, %arg7: memref<16x1xf32, #tpu.memory_space<vmem>>, %arg8: memref<16x16xbf16, #tpu.memory_space<vmem>>, %arg9: memref<16x1xf32, #tpu.memory_space<vmem>>, %arg10: memref<32x16xbf16, #tpu.memory_space<vmem>>, %arg11: memref<32x1xf32, #tpu.memory_space<vmem>>, %arg12: memref<32x256xf32, #tpu.memory_space<vmem>>) attributes {dimension_semantics = [], scalar_prefetch = 0 : i64, scratch_operands = 0 : i64, tpu.core_type = #tpu.core_type<tc>} {
    %c0 = arith.constant 0 : index
    %c0_0 = arith.constant 0 : index
    %0 = vector.load %arg0[%c0, %c0_0] : memref<16x256xf32, #tpu.memory_space<vmem>>, vector<16x256xf32>
    %c0_1 = arith.constant 0 : index
    %c0_2 = arith.constant 0 : index
    %1 = vector.load %arg3[%c0_1, %c0_2] : memref<128x8xbf16, #tpu.memory_space<vmem>>, vector<128x8xbf16>
    %c0_3 = arith.constant 0 : index
    %c0_4 = arith.constant 0 : index
    %2 = vector.load %arg1[%c0_3, %c0_4] : memref<8x256xbf16, #tpu.memory_space<vmem>>, vector<8x256xbf16>
    %cst = arith.constant dense<0.000000e+00> : vector<128x256xf32>
    %3 = tpu.matmul %1, %2, %cst {dimension_numbers = #tpu.dot_dimension_numbers<[1], [0], [0], [1], [0, 0, 1, 1], [], []>} : vector<128x8xbf16>, vector<8x256xbf16>, vector<128x256xf32> -> vector<128x256xf32>
    %c0_5 = arith.constant 0 : index
    %c0_6 = arith.constant 0 : index
    %4 = vector.load %arg4[%c0_5, %c0_6] : memref<128x1xf32, #tpu.memory_space<vmem>>, vector<128x1xf32>
    %5 = vector.broadcast %4 : vector<128x1xf32> to vector<128x256xf32>
    %6 = arith.addf %3, %5 : vector<128x256xf32>
    %7 = tpu.iota {dimensions = array<i32: 1>} : vector<16x256xi32>
    %c128_i32 = arith.constant 128 : i32
    %c0_i32 = arith.constant 0 : i32
    %8 = arith.cmpi eq, %c128_i32, %c0_i32 : i32
    %c1_i32 = arith.constant 1 : i32
    %9 = arith.select %8, %c1_i32, %c128_i32 : i32
    %10 = vector.broadcast %9 : i32 to vector<16x256xi32>
    %11 = arith.remsi %7, %10 : vector<16x256xi32>
    %c0_i32_7 = arith.constant 0 : i32
    %12 = vector.broadcast %c0_i32_7 : i32 to vector<16x256xi32>
    %13 = arith.cmpi ne, %11, %12 : vector<16x256xi32>
    %c0_i32_8 = arith.constant 0 : i32
    %14 = vector.broadcast %c0_i32_8 : i32 to vector<16x256xi32>
    %15 = arith.cmpi slt, %11, %14 : vector<16x256xi32>
    %c0_i32_9 = arith.constant 0 : i32
    %16 = arith.cmpi slt, %9, %c0_i32_9 : i32
    %17 = vector.broadcast %16 : i1 to vector<16x256xi1>
    %18 = vector.broadcast %17 : vector<16x256xi1> to vector<16x256xi1>
    %19 = arith.xori %15, %18 : vector<16x256xi1>
    %20 = arith.andi %19, %13 : vector<16x256xi1>
    %21 = vector.broadcast %9 : i32 to vector<16x256xi32>
    %22 = arith.addi %11, %21 : vector<16x256xi32>
    %23 = arith.select %20, %22, %11 : vector<16x256xi1>, vector<16x256xi32>
    %c1_i32_10 = arith.constant 1 : i32
    %24 = vector.broadcast %c1_i32_10 : i32 to vector<16x256xi32>
    %25 = arith.cmpi sge, %23, %24 : vector<16x256xi32>
    %c2_i32 = arith.constant 2 : i32
    %26 = vector.broadcast %c2_i32 : i32 to vector<16x256xi32>
    %27 = arith.cmpi sge, %23, %26 : vector<16x256xi32>
    %cst_11 = arith.constant 0.000000e+00 : f32
    %28 = vector.broadcast %cst_11 : f32 to vector<16x256xf32>
    %29 = arith.truncf %0 : vector<16x256xf32> to vector<16x256xbf16>
    %c1_i32_12 = arith.constant 1 : i32
    %30 = tpu.dynamic_rotate %0 by %c1_i32_12 dim 1 : vector<16x256xf32>, i32 -> vector<16x256xf32>
    %cst_13 = arith.constant 0.000000e+00 : f32
    %31 = vector.broadcast %cst_13 : f32 to vector<16x256xf32>
    %32 = arith.select %25, %30, %31 : vector<16x256xi1>, vector<16x256xf32>
    %33 = arith.truncf %32 : vector<16x256xf32> to vector<16x256xbf16>
    %34 = tpu.concatenate %33, %29 in 0 : vector<16x256xbf16>, vector<16x256xbf16> -> vector<32x256xbf16>
    %c0_14 = arith.constant 0 : index
    %c0_15 = arith.constant 0 : index
    %c0_16 = arith.constant 0 : index
    %35 = vector.load %arg2[%c0_14, %c0_15, %c0_16] : memref<4x32x32xbf16, #tpu.memory_space<vmem>>, vector<1x32x32xbf16>
    %36 = vector.shape_cast %35 : vector<1x32x32xbf16> to vector<32x32xbf16>
    %cst_17 = arith.constant dense<0.000000e+00> : vector<32x256xf32>
    %37 = tpu.matmul %36, %34, %cst_17 {dimension_numbers = #tpu.dot_dimension_numbers<[1], [0], [0], [1], [0, 0, 1, 1], [], []>} : vector<32x32xbf16>, vector<32x256xbf16>, vector<32x256xf32> -> vector<32x256xf32>
    %38 = vector.extract_strided_slice %6 {offsets = [0, 0], sizes = [32, 256], strides = [1, 1]} : vector<128x256xf32> to vector<32x256xf32>
    %39 = arith.addf %37, %38 : vector<32x256xf32>
    %40 = vector.extract_strided_slice %39 {offsets = [0, 0], sizes = [16, 256], strides = [1, 1]} : vector<32x256xf32> to vector<16x256xf32>
    %41 = math.tanh %40 : vector<16x256xf32>
    %42 = vector.extract_strided_slice %39 {offsets = [16, 0], sizes = [16, 256], strides = [1, 1]} : vector<32x256xf32> to vector<16x256xf32>
    %43 = arith.negf %42 : vector<16x256xf32>
    %44 = math.exp %43 : vector<16x256xf32>
    %cst_18 = arith.constant 1.000000e+00 : f32
    %45 = vector.broadcast %cst_18 : f32 to vector<16x256xf32>
    %46 = arith.addf %45, %44 : vector<16x256xf32>
    %47 = arith.divf %45, %46 : vector<16x256xf32>
    %48 = arith.mulf %41, %47 : vector<16x256xf32>
    %49 = arith.truncf %48 : vector<16x256xf32> to vector<16x256xbf16>
    %c0_19 = arith.constant 0 : index
    %c0_20 = arith.constant 0 : index
    %c0_21 = arith.constant 0 : index
    %50 = vector.load %arg5[%c0_19, %c0_20, %c0_21] : memref<4x32x16xbf16, #tpu.memory_space<vmem>>, vector<1x32x16xbf16>
    %51 = vector.shape_cast %50 : vector<1x32x16xbf16> to vector<32x16xbf16>
    %cst_22 = arith.constant dense<0.000000e+00> : vector<32x256xf32>
    %52 = tpu.matmul %51, %49, %cst_22 {dimension_numbers = #tpu.dot_dimension_numbers<[1], [0], [0], [1], [0, 0, 1, 1], [], []>} : vector<32x16xbf16>, vector<16x256xbf16>, vector<32x256xf32> -> vector<32x256xf32>
    %53 = vector.extract_strided_slice %52 {offsets = [0, 0], sizes = [16, 256], strides = [1, 1]} : vector<32x256xf32> to vector<16x256xf32>
    %54 = arith.addf %28, %53 : vector<16x256xf32>
    %55 = vector.extract_strided_slice %52 {offsets = [16, 0], sizes = [16, 256], strides = [1, 1]} : vector<32x256xf32> to vector<16x256xf32>
    %c0_23 = arith.constant 0 : index
    %c0_24 = arith.constant 0 : index
    %c0_25 = arith.constant 0 : index
    %56 = vector.load %arg6[%c0_23, %c0_24, %c0_25] : memref<4x16x1xf32, #tpu.memory_space<vmem>>, vector<1x16x1xf32>
    %57 = vector.shape_cast %56 : vector<1x16x1xf32> to vector<16x1xf32>
    %58 = vector.broadcast %57 : vector<16x1xf32> to vector<16x256xf32>
    %59 = arith.addf %55, %58 : vector<16x256xf32>
    %60 = arith.addf %59, %0 : vector<16x256xf32>
    %61 = arith.truncf %60 : vector<16x256xf32> to vector<16x256xbf16>
    %c2_i32_26 = arith.constant 2 : i32
    %62 = tpu.dynamic_rotate %60 by %c2_i32_26 dim 1 : vector<16x256xf32>, i32 -> vector<16x256xf32>
    %cst_27 = arith.constant 0.000000e+00 : f32
    %63 = vector.broadcast %cst_27 : f32 to vector<16x256xf32>
    %64 = arith.select %27, %62, %63 : vector<16x256xi1>, vector<16x256xf32>
    %65 = arith.truncf %64 : vector<16x256xf32> to vector<16x256xbf16>
    %66 = tpu.concatenate %65, %61 in 0 : vector<16x256xbf16>, vector<16x256xbf16> -> vector<32x256xbf16>
    %c1 = arith.constant 1 : index
    %c0_28 = arith.constant 0 : index
    %c0_29 = arith.constant 0 : index
    %67 = vector.load %arg2[%c1, %c0_28, %c0_29] : memref<4x32x32xbf16, #tpu.memory_space<vmem>>, vector<1x32x32xbf16>
    %68 = vector.shape_cast %67 : vector<1x32x32xbf16> to vector<32x32xbf16>
    %cst_30 = arith.constant dense<0.000000e+00> : vector<32x256xf32>
    %69 = tpu.matmul %68, %66, %cst_30 {dimension_numbers = #tpu.dot_dimension_numbers<[1], [0], [0], [1], [0, 0, 1, 1], [], []>} : vector<32x32xbf16>, vector<32x256xbf16>, vector<32x256xf32> -> vector<32x256xf32>
    %70 = vector.extract_strided_slice %6 {offsets = [32, 0], sizes = [32, 256], strides = [1, 1]} : vector<128x256xf32> to vector<32x256xf32>
    %71 = arith.addf %69, %70 : vector<32x256xf32>
    %72 = vector.extract_strided_slice %71 {offsets = [0, 0], sizes = [16, 256], strides = [1, 1]} : vector<32x256xf32> to vector<16x256xf32>
    %73 = math.tanh %72 : vector<16x256xf32>
    %74 = vector.extract_strided_slice %71 {offsets = [16, 0], sizes = [16, 256], strides = [1, 1]} : vector<32x256xf32> to vector<16x256xf32>
    %75 = arith.negf %74 : vector<16x256xf32>
    %76 = math.exp %75 : vector<16x256xf32>
    %cst_31 = arith.constant 1.000000e+00 : f32
    %77 = vector.broadcast %cst_31 : f32 to vector<16x256xf32>
    %78 = arith.addf %77, %76 : vector<16x256xf32>
    %79 = arith.divf %77, %78 : vector<16x256xf32>
    %80 = arith.mulf %73, %79 : vector<16x256xf32>
    %81 = arith.truncf %80 : vector<16x256xf32> to vector<16x256xbf16>
    %c1_32 = arith.constant 1 : index
    %c0_33 = arith.constant 0 : index
    %c0_34 = arith.constant 0 : index
    %82 = vector.load %arg5[%c1_32, %c0_33, %c0_34] : memref<4x32x16xbf16, #tpu.memory_space<vmem>>, vector<1x32x16xbf16>
    %83 = vector.shape_cast %82 : vector<1x32x16xbf16> to vector<32x16xbf16>
    %cst_35 = arith.constant dense<0.000000e+00> : vector<32x256xf32>
    %84 = tpu.matmul %83, %81, %cst_35 {dimension_numbers = #tpu.dot_dimension_numbers<[1], [0], [0], [1], [0, 0, 1, 1], [], []>} : vector<32x16xbf16>, vector<16x256xbf16>, vector<32x256xf32> -> vector<32x256xf32>
    %85 = vector.extract_strided_slice %84 {offsets = [0, 0], sizes = [16, 256], strides = [1, 1]} : vector<32x256xf32> to vector<16x256xf32>
    %86 = arith.addf %54, %85 : vector<16x256xf32>
    %87 = vector.extract_strided_slice %84 {offsets = [16, 0], sizes = [16, 256], strides = [1, 1]} : vector<32x256xf32> to vector<16x256xf32>
    %c1_36 = arith.constant 1 : index
    %c0_37 = arith.constant 0 : index
    %c0_38 = arith.constant 0 : index
    %88 = vector.load %arg6[%c1_36, %c0_37, %c0_38] : memref<4x16x1xf32, #tpu.memory_space<vmem>>, vector<1x16x1xf32>
    %89 = vector.shape_cast %88 : vector<1x16x1xf32> to vector<16x1xf32>
    %90 = vector.broadcast %89 : vector<16x1xf32> to vector<16x256xf32>
    %91 = arith.addf %87, %90 : vector<16x256xf32>
    %92 = arith.addf %91, %60 : vector<16x256xf32>
    %93 = arith.truncf %92 : vector<16x256xf32> to vector<16x256xbf16>
    %c1_i32_39 = arith.constant 1 : i32
    %94 = tpu.dynamic_rotate %92 by %c1_i32_39 dim 1 : vector<16x256xf32>, i32 -> vector<16x256xf32>
    %cst_40 = arith.constant 0.000000e+00 : f32
    %95 = vector.broadcast %cst_40 : f32 to vector<16x256xf32>
    %96 = arith.select %25, %94, %95 : vector<16x256xi1>, vector<16x256xf32>
    %97 = arith.truncf %96 : vector<16x256xf32> to vector<16x256xbf16>
    %98 = tpu.concatenate %97, %93 in 0 : vector<16x256xbf16>, vector<16x256xbf16> -> vector<32x256xbf16>
    %c2 = arith.constant 2 : index
    %c0_41 = arith.constant 0 : index
    %c0_42 = arith.constant 0 : index
    %99 = vector.load %arg2[%c2, %c0_41, %c0_42] : memref<4x32x32xbf16, #tpu.memory_space<vmem>>, vector<1x32x32xbf16>
    %100 = vector.shape_cast %99 : vector<1x32x32xbf16> to vector<32x32xbf16>
    %cst_43 = arith.constant dense<0.000000e+00> : vector<32x256xf32>
    %101 = tpu.matmul %100, %98, %cst_43 {dimension_numbers = #tpu.dot_dimension_numbers<[1], [0], [0], [1], [0, 0, 1, 1], [], []>} : vector<32x32xbf16>, vector<32x256xbf16>, vector<32x256xf32> -> vector<32x256xf32>
    %102 = vector.extract_strided_slice %6 {offsets = [64, 0], sizes = [32, 256], strides = [1, 1]} : vector<128x256xf32> to vector<32x256xf32>
    %103 = arith.addf %101, %102 : vector<32x256xf32>
    %104 = vector.extract_strided_slice %103 {offsets = [0, 0], sizes = [16, 256], strides = [1, 1]} : vector<32x256xf32> to vector<16x256xf32>
    %105 = math.tanh %104 : vector<16x256xf32>
    %106 = vector.extract_strided_slice %103 {offsets = [16, 0], sizes = [16, 256], strides = [1, 1]} : vector<32x256xf32> to vector<16x256xf32>
    %107 = arith.negf %106 : vector<16x256xf32>
    %108 = math.exp %107 : vector<16x256xf32>
    %cst_44 = arith.constant 1.000000e+00 : f32
    %109 = vector.broadcast %cst_44 : f32 to vector<16x256xf32>
    %110 = arith.addf %109, %108 : vector<16x256xf32>
    %111 = arith.divf %109, %110 : vector<16x256xf32>
    %112 = arith.mulf %105, %111 : vector<16x256xf32>
    %113 = arith.truncf %112 : vector<16x256xf32> to vector<16x256xbf16>
    %c2_45 = arith.constant 2 : index
    %c0_46 = arith.constant 0 : index
    %c0_47 = arith.constant 0 : index
    %114 = vector.load %arg5[%c2_45, %c0_46, %c0_47] : memref<4x32x16xbf16, #tpu.memory_space<vmem>>, vector<1x32x16xbf16>
    %115 = vector.shape_cast %114 : vector<1x32x16xbf16> to vector<32x16xbf16>
    %cst_48 = arith.constant dense<0.000000e+00> : vector<32x256xf32>
    %116 = tpu.matmul %115, %113, %cst_48 {dimension_numbers = #tpu.dot_dimension_numbers<[1], [0], [0], [1], [0, 0, 1, 1], [], []>} : vector<32x16xbf16>, vector<16x256xbf16>, vector<32x256xf32> -> vector<32x256xf32>
    %117 = vector.extract_strided_slice %116 {offsets = [0, 0], sizes = [16, 256], strides = [1, 1]} : vector<32x256xf32> to vector<16x256xf32>
    %118 = arith.addf %86, %117 : vector<16x256xf32>
    %119 = vector.extract_strided_slice %116 {offsets = [16, 0], sizes = [16, 256], strides = [1, 1]} : vector<32x256xf32> to vector<16x256xf32>
    %c2_49 = arith.constant 2 : index
    %c0_50 = arith.constant 0 : index
    %c0_51 = arith.constant 0 : index
    %120 = vector.load %arg6[%c2_49, %c0_50, %c0_51] : memref<4x16x1xf32, #tpu.memory_space<vmem>>, vector<1x16x1xf32>
    %121 = vector.shape_cast %120 : vector<1x16x1xf32> to vector<16x1xf32>
    %122 = vector.broadcast %121 : vector<16x1xf32> to vector<16x256xf32>
    %123 = arith.addf %119, %122 : vector<16x256xf32>
    %124 = arith.addf %123, %92 : vector<16x256xf32>
    %125 = arith.truncf %124 : vector<16x256xf32> to vector<16x256xbf16>
    %c2_i32_52 = arith.constant 2 : i32
    %126 = tpu.dynamic_rotate %124 by %c2_i32_52 dim 1 : vector<16x256xf32>, i32 -> vector<16x256xf32>
    %cst_53 = arith.constant 0.000000e+00 : f32
    %127 = vector.broadcast %cst_53 : f32 to vector<16x256xf32>
    %128 = arith.select %27, %126, %127 : vector<16x256xi1>, vector<16x256xf32>
    %129 = arith.truncf %128 : vector<16x256xf32> to vector<16x256xbf16>
    %130 = tpu.concatenate %129, %125 in 0 : vector<16x256xbf16>, vector<16x256xbf16> -> vector<32x256xbf16>
    %c3 = arith.constant 3 : index
    %c0_54 = arith.constant 0 : index
    %c0_55 = arith.constant 0 : index
    %131 = vector.load %arg2[%c3, %c0_54, %c0_55] : memref<4x32x32xbf16, #tpu.memory_space<vmem>>, vector<1x32x32xbf16>
    %132 = vector.shape_cast %131 : vector<1x32x32xbf16> to vector<32x32xbf16>
    %cst_56 = arith.constant dense<0.000000e+00> : vector<32x256xf32>
    %133 = tpu.matmul %132, %130, %cst_56 {dimension_numbers = #tpu.dot_dimension_numbers<[1], [0], [0], [1], [0, 0, 1, 1], [], []>} : vector<32x32xbf16>, vector<32x256xbf16>, vector<32x256xf32> -> vector<32x256xf32>
    %134 = vector.extract_strided_slice %6 {offsets = [96, 0], sizes = [32, 256], strides = [1, 1]} : vector<128x256xf32> to vector<32x256xf32>
    %135 = arith.addf %133, %134 : vector<32x256xf32>
    %136 = vector.extract_strided_slice %135 {offsets = [0, 0], sizes = [16, 256], strides = [1, 1]} : vector<32x256xf32> to vector<16x256xf32>
    %137 = math.tanh %136 : vector<16x256xf32>
    %138 = vector.extract_strided_slice %135 {offsets = [16, 0], sizes = [16, 256], strides = [1, 1]} : vector<32x256xf32> to vector<16x256xf32>
    %139 = arith.negf %138 : vector<16x256xf32>
    %140 = math.exp %139 : vector<16x256xf32>
    %cst_57 = arith.constant 1.000000e+00 : f32
    %141 = vector.broadcast %cst_57 : f32 to vector<16x256xf32>
    %142 = arith.addf %141, %140 : vector<16x256xf32>
    %143 = arith.divf %141, %142 : vector<16x256xf32>
    %144 = arith.mulf %137, %143 : vector<16x256xf32>
    %145 = arith.truncf %144 : vector<16x256xf32> to vector<16x256xbf16>
    %c3_58 = arith.constant 3 : index
    %c0_59 = arith.constant 0 : index
    %c0_60 = arith.constant 0 : index
    %146 = vector.load %arg5[%c3_58, %c0_59, %c0_60] : memref<4x32x16xbf16, #tpu.memory_space<vmem>>, vector<1x32x16xbf16>
    %147 = vector.shape_cast %146 : vector<1x32x16xbf16> to vector<32x16xbf16>
    %cst_61 = arith.constant dense<0.000000e+00> : vector<32x256xf32>
    %148 = tpu.matmul %147, %145, %cst_61 {dimension_numbers = #tpu.dot_dimension_numbers<[1], [0], [0], [1], [0, 0, 1, 1], [], []>} : vector<32x16xbf16>, vector<16x256xbf16>, vector<32x256xf32> -> vector<32x256xf32>
    %149 = vector.extract_strided_slice %148 {offsets = [0, 0], sizes = [16, 256], strides = [1, 1]} : vector<32x256xf32> to vector<16x256xf32>
    %150 = arith.addf %118, %149 : vector<16x256xf32>
    %c0_62 = arith.constant 0 : index
    %c0_63 = arith.constant 0 : index
    %151 = vector.load %arg7[%c0_62, %c0_63] : memref<16x1xf32, #tpu.memory_space<vmem>>, vector<16x1xf32>
    %152 = vector.broadcast %151 : vector<16x1xf32> to vector<16x256xf32>
    %153 = arith.addf %150, %152 : vector<16x256xf32>
    %cst_64 = arith.constant 0.000000e+00 : f32
    %154 = vector.broadcast %cst_64 : f32 to vector<16x256xf32>
    %155 = arith.maximumf %153, %154 : vector<16x256xf32>
    %c0_65 = arith.constant 0 : index
    %c0_66 = arith.constant 0 : index
    %156 = vector.load %arg8[%c0_65, %c0_66] : memref<16x16xbf16, #tpu.memory_space<vmem>>, vector<16x16xbf16>
    %157 = arith.truncf %155 : vector<16x256xf32> to vector<16x256xbf16>
    %cst_67 = arith.constant dense<0.000000e+00> : vector<16x256xf32>
    %158 = tpu.matmul %156, %157, %cst_67 {dimension_numbers = #tpu.dot_dimension_numbers<[1], [0], [0], [1], [0, 0, 1, 1], [], []>} : vector<16x16xbf16>, vector<16x256xbf16>, vector<16x256xf32> -> vector<16x256xf32>
    %c0_68 = arith.constant 0 : index
    %c0_69 = arith.constant 0 : index
    %159 = vector.load %arg9[%c0_68, %c0_69] : memref<16x1xf32, #tpu.memory_space<vmem>>, vector<16x1xf32>
    %160 = vector.broadcast %159 : vector<16x1xf32> to vector<16x256xf32>
    %161 = arith.addf %158, %160 : vector<16x256xf32>
    %cst_70 = arith.constant 0.000000e+00 : f32
    %162 = vector.broadcast %cst_70 : f32 to vector<16x256xf32>
    %163 = arith.maximumf %161, %162 : vector<16x256xf32>
    %c0_71 = arith.constant 0 : index
    %c0_72 = arith.constant 0 : index
    %164 = vector.load %arg10[%c0_71, %c0_72] : memref<32x16xbf16, #tpu.memory_space<vmem>>, vector<32x16xbf16>
    %165 = arith.truncf %163 : vector<16x256xf32> to vector<16x256xbf16>
    %cst_73 = arith.constant dense<0.000000e+00> : vector<32x256xf32>
    %166 = tpu.matmul %164, %165, %cst_73 {dimension_numbers = #tpu.dot_dimension_numbers<[1], [0], [0], [1], [0, 0, 1, 1], [], []>} : vector<32x16xbf16>, vector<16x256xbf16>, vector<32x256xf32> -> vector<32x256xf32>
    %c0_74 = arith.constant 0 : index
    %c0_75 = arith.constant 0 : index
    %167 = vector.load %arg11[%c0_74, %c0_75] : memref<32x1xf32, #tpu.memory_space<vmem>>, vector<32x1xf32>
    %168 = vector.broadcast %167 : vector<32x1xf32> to vector<32x256xf32>
    %169 = arith.addf %166, %168 : vector<32x256xf32>
    %c0_76 = arith.constant 0 : index
    %c0_77 = arith.constant 0 : index
    %170 = vector.load %arg12[%c0_76, %c0_77] : memref<32x256xf32, #tpu.memory_space<vmem>>, vector<32x256xf32>
    tpu.vector_store %arg12[%c0_76, %c0_77], %169 {strides = array<i32>} : memref<32x256xf32, #tpu.memory_space<vmem>>, vector<32x256xf32>,
    return
  }
}

</mosaic_0001>

<llo_original>
// kernel: tpu_custom_call.1
$region0: #{tpu_custom_call.1}
  #allocation0 [shape = 'u32[]', space=smem, size = 0x4, offset = 0x4, fixed_abs, tag = 'smem constant byte address 0x4 - core index']
  #allocation1 [shape = 'u32[72,128]{1,0:T(1,128)}', space=vmem, size = 0x9000, scoped, tag = 'internal scratch']
  %s0 = inlined_call_operand.vmem [shape: f32[16,256], index: 0, kind: input, shape index: {}]
  %s1 = inlined_call_operand.vmem [shape: bf16[8,256], index: 1, kind: input, shape index: {}]
  %s2 = inlined_call_operand.vmem [shape: bf16[4,32,32], index: 2, kind: input, shape index: {}]
  %s3 = inlined_call_operand.vmem [shape: bf16[128,8], index: 3, kind: input, shape index: {}]
  %s4 = inlined_call_operand.vmem [shape: f32[128,1], index: 4, kind: input, shape index: {}]
  %s5 = inlined_call_operand.vmem [shape: bf16[4,32,16], index: 5, kind: input, shape index: {}]
  %s6 = inlined_call_operand.vmem [shape: f32[4,16,1], index: 6, kind: input, shape index: {}]
  %s7 = inlined_call_operand.vmem [shape: f32[16,1], index: 7, kind: input, shape index: {}]
  %s8 = inlined_call_operand.vmem [shape: bf16[16,16], index: 8, kind: input, shape index: {}]
  %s9 = inlined_call_operand.vmem [shape: f32[16,1], index: 9, kind: input, shape index: {}]
  %s10 = inlined_call_operand.vmem [shape: bf16[32,16], index: 10, kind: input, shape index: {}]
  %s11 = inlined_call_operand.vmem [shape: f32[32,1], index: 11, kind: input, shape index: {}]
  %s12 = inlined_call_operand.hbm [shape: f32[32,256], index: 12, kind: output, shape index: {}]
  %s13 = sld [smem:[#allocation0]]
  $region58: #{tpu_custom_call.1} parent=0
    _
  %s15 = ssub.s32 1, %s13
  %s16 = scalar_select 0, %s15, %s13
  $region1: #{tpu_custom_call.1} parent=0
    #allocation2 [shape = 'u8[32768]{0}', space=vmem, size = 0x8000, scoped, tag = 'output window, operand 0, single buffered']
    #allocation3 [shape = 's32[1]{0}', space=sflag, size = 0x4, scoped, tag = 'scoped memory for tpu_custom_call.1']
    %17 = vsyncpa [#allocation3], 0
    // Predicated region
    $region2: #{tpu_custom_call.1} parent=1 // pred_check
      _
    $region3: #{tpu_custom_call.1} parent=1 // pred_check_branch
      %19 = sbr.rel (0) target = $region5
    $region4: #{tpu_custom_call.1} parent=1 // pred_region
      _
    $region5: #{tpu_custom_call.1} parent=1 // pred_fallthru
      _
    // Predicated region
    $region6: #{tpu_custom_call.1} parent=1 // pred_check
      _
    $region7: #{tpu_custom_call.1} parent=1 // pred_check_branch
      %21 = sbr.rel (0) target = $region9
    $region8: #{tpu_custom_call.1} parent=1 // pred_region
      _
    $region9: #{tpu_custom_call.1} parent=1 // pred_fallthru
      _
    // Predicated region
    $region10: #{tpu_custom_call.1} parent=1 // pred_check
      _
    $region11: #{tpu_custom_call.1} parent=1 // pred_check_branch
      %23 = sbr.rel (0) target = $region13
    $region12: #{tpu_custom_call.1} parent=1 // pred_region
      _
    $region13: #{tpu_custom_call.1} parent=1 // pred_fallthru
      _
    // Predicated region
    $region14: #{tpu_custom_call.1} parent=1 // pred_check
      _
    $region15: #{tpu_custom_call.1} parent=1 // pred_check_branch
      %25 = sbr.rel (0) target = $region17
    $region16: #{tpu_custom_call.1} parent=1 // pred_region
      _
    $region17: #{tpu_custom_call.1} parent=1 // pred_fallthru
      _
    // Predicated region
    $region18: #{tpu_custom_call.1} parent=1 // pred_check
      _
    $region19: #{tpu_custom_call.1} parent=1 // pred_check_branch
      %27 = sbr.rel (0) target = $region21
    $region20: #{tpu_custom_call.1} parent=1 // pred_region
      _
    $region21: #{tpu_custom_call.1} parent=1 // pred_fallthru
      _
    // Predicated region
    $region22: #{tpu_custom_call.1} parent=1 // pred_check
      _
    $region23: #{tpu_custom_call.1} parent=1 // pred_check_branch
      %29 = sbr.rel (0) target = $region25
    $region24: #{tpu_custom_call.1} parent=1 // pred_region
      _
    $region25: #{tpu_custom_call.1} parent=1 // pred_fallthru
      _
    // Predicated region
    $region26: #{tpu_custom_call.1} parent=1 // pred_check
      _
    $region27: #{tpu_custom_call.1} parent=1 // pred_check_branch
      %31 = sbr.rel (0) target = $region29
    $region28: #{tpu_custom_call.1} parent=1 // pred_region
      _
    $region29: #{tpu_custom_call.1} parent=1 // pred_fallthru
      _
    // Predicated region
    $region30: #{tpu_custom_call.1} parent=1 // pred_check
      _
    $region31: #{tpu_custom_call.1} parent=1 // pred_check_branch
      %33 = sbr.rel (0) target = $region33
    $region32: #{tpu_custom_call.1} parent=1 // pred_region
      _
    $region33: #{tpu_custom_call.1} parent=1 // pred_fallthru
      _
    // Predicated region
    $region34: #{tpu_custom_call.1} parent=1 // pred_check
      _
    $region35: #{tpu_custom_call.1} parent=1 // pred_check_branch
      %35 = sbr.rel (0) target = $region37
    $region36: #{tpu_custom_call.1} parent=1 // pred_region
      _
    $region37: #{tpu_custom_call.1} parent=1 // pred_fallthru
      _
    // Predicated region
    $region38: #{tpu_custom_call.1} parent=1 // pred_check
      _
    $region39: #{tpu_custom_call.1} parent=1 // pred_check_branch
      %37 = sbr.rel (0) target = $region41
    $region40: #{tpu_custom_call.1} parent=1 // pred_region
      _
    $region41: #{tpu_custom_call.1} parent=1 // pred_fallthru
      _
    // Predicated region
    $region42: #{tpu_custom_call.1} parent=1 // pred_check
      _
    $region43: #{tpu_custom_call.1} parent=1 // pred_check_branch
      %39 = sbr.rel (0) target = $region45
    $region44: #{tpu_custom_call.1} parent=1 // pred_region
      _
    $region45: #{tpu_custom_call.1} parent=1 // pred_fallthru
      _
    // Predicated region
    $region46: #{tpu_custom_call.1} parent=1 // pred_check
      _
    $region47: #{tpu_custom_call.1} parent=1 // pred_check_branch
      %41 = sbr.rel (0) target = $region49
    $region48: #{tpu_custom_call.1} parent=1 // pred_region
      _
    $region49: #{tpu_custom_call.1} parent=1 // pred_fallthru
      _
    %v43 = vld [vmem:[%s0] sm:$0xff]
    %v44 = vld [vmem:[%s0 + $0x8] sm:$0xff]
    %v45 = vld [vmem:[%s0 + $0x10] sm:$0xff]
    %v46 = vld [vmem:[%s0 + $0x18] sm:$0xff]
    %v47 = vld [vmem:[%s3] sm:$0xf]
    %v48 = vld [vmem:[%s3 + $0x4] sm:$0xf]
    %v49 = vld [vmem:[%s3 + $0x8] sm:$0xf]
    %v50 = vld [vmem:[%s3 + $0xc] sm:$0xf]
    %v51 = vld [vmem:[%s3 + $0x10] sm:$0xf]
    %v52 = vld [vmem:[%s3 + $0x14] sm:$0xf]
    %v53 = vld [vmem:[%s3 + $0x18] sm:$0xf]
    %v54 = vld [vmem:[%s3 + $0x1c] sm:$0xf]
    %v55 = vld [vmem:[%s3 + $0x20] sm:$0xf]
    %v56 = vld [vmem:[%s3 + $0x24] sm:$0xf]
    %v57 = vld [vmem:[%s3 + $0x28] sm:$0xf]
    %v58 = vld [vmem:[%s3 + $0x2c] sm:$0xf]
    %v59 = vld [vmem:[%s3 + $0x30] sm:$0xf]
    %v60 = vld [vmem:[%s3 + $0x34] sm:$0xf]
    %v61 = vld [vmem:[%s3 + $0x38] sm:$0xf]
    %v62 = vld [vmem:[%s3 + $0x3c] sm:$0xf]
    %v63 = vld [vmem:[%s1] sm:$0xff]
    %v64 = vld [vmem:[%s4] sm:$0xff]
    %v65 = vld [vmem:[%s4 + $0x8] sm:$0xff]
    %v66 = vld [vmem:[%s4 + $0x10] sm:$0xff]
    %v67 = vld [vmem:[%s4 + $0x18] sm:$0xff]
    %v68 = vld [vmem:[%s4 + $0x20] sm:$0xff]
    %v69 = vld [vmem:[%s4 + $0x28] sm:$0xff]
    %v70 = vld [vmem:[%s4 + $0x30] sm:$0xff]
    %v71 = vld [vmem:[%s4 + $0x38] sm:$0xff]
    %v72 = vld [vmem:[%s4 + $0x40] sm:$0xff]
    %v73 = vld [vmem:[%s4 + $0x48] sm:$0xff]
    %v74 = vld [vmem:[%s4 + $0x50] sm:$0xff]
    %v75 = vld [vmem:[%s4 + $0x58] sm:$0xff]
    %v76 = vld [vmem:[%s4 + $0x60] sm:$0xff]
    %v77 = vld [vmem:[%s4 + $0x68] sm:$0xff]
    %v78 = vld [vmem:[%s4 + $0x70] sm:$0xff]
    %v79 = vld [vmem:[%s4 + $0x78] sm:$0xff]
    %81 = vset.pattern.permute.xlu0 0
    %82 = vperm.xlu0 %81, %v64
    %v83 = vpop.permute.xlu0 %82
    %86 = vset.pattern.permute.xlu0 0
    %87 = vperm.xlu0 %86, %v65
    %v88 = vpop.permute.xlu0 %87
    %91 = vset.pattern.permute.xlu0 0
    %92 = vperm.xlu0 %91, %v66
    %v93 = vpop.permute.xlu0 %92
    %96 = vset.pattern.permute.xlu0 0
    %97 = vperm.xlu0 %96, %v67
    %v98 = vpop.permute.xlu0 %97
    %101 = vset.pattern.permute.xlu0 0
    %102 = vperm.xlu0 %101, %v68
    %v103 = vpop.permute.xlu0 %102
    %106 = vset.pattern.permute.xlu0 0
    %107 = vperm.xlu0 %106, %v69
    %v108 = vpop.permute.xlu0 %107
    %111 = vset.pattern.permute.xlu0 0
    %112 = vperm.xlu0 %111, %v70
    %v113 = vpop.permute.xlu0 %112
    %116 = vset.pattern.permute.xlu0 0
    %117 = vperm.xlu0 %116, %v71
    %v118 = vpop.permute.xlu0 %117
    %121 = vset.pattern.permute.xlu0 0
    %122 = vperm.xlu0 %121, %v72
    %v123 = vpop.permute.xlu0 %122
    %126 = vset.pattern.permute.xlu0 0
    %127 = vperm.xlu0 %126, %v73
    %v128 = vpop.permute.xlu0 %127
    %131 = vset.pattern.permute.xlu0 0
    %132 = vperm.xlu0 %131, %v74
    %v133 = vpop.permute.xlu0 %132
    %136 = vset.pattern.permute.xlu0 0
    %137 = vperm.xlu0 %136, %v75
    %v138 = vpop.permute.xlu0 %137
    %141 = vset.pattern.permute.xlu0 0
    %142 = vperm.xlu0 %141, %v76
    %v143 = vpop.permute.xlu0 %142
    %146 = vset.pattern.permute.xlu0 0
    %147 = vperm.xlu0 %146, %v77
    %v148 = vpop.permute.xlu0 %147
    %151 = vset.pattern.permute.xlu0 0
    %152 = vperm.xlu0 %151, %v78
    %v153 = vpop.permute.xlu0 %152
    %156 = vset.pattern.permute.xlu0 0
    %157 = vperm.xlu0 %156, %v79
    %v158 = vpop.permute.xlu0 %157
    %v176 = vunpack.c.l.b16 %v47
    %v177 = vunpack.c.l.b16 %v48
    %v178 = vunpack.c.l.b16 %v49
    %v179 = vunpack.c.l.b16 %v50
    %v180 = vunpack.c.l.b16 %v51
    %v181 = vunpack.c.l.b16 %v52
    %v182 = vunpack.c.l.b16 %v53
    %v183 = vunpack.c.l.b16 %v54
    %v184 = vunpack.c.l.b16 %v55
    %v185 = vunpack.c.l.b16 %v56
    %v186 = vunpack.c.l.b16 %v57
    %v187 = vunpack.c.l.b16 %v58
    %v188 = vunpack.c.l.b16 %v59
    %v189 = vunpack.c.l.b16 %v60
    %v190 = vunpack.c.l.b16 %v61
    %v191 = vunpack.c.l.b16 %v62
    %v192 = vpack.c.b16 %v177, %v176
    %v193 = vpack.c.b16 %v179, %v178
    %v194 = vpack.c.b16 %v181, %v180
    %v195 = vpack.c.b16 %v183, %v182
    %v196 = vpack.c.b16 %v185, %v184
    %v197 = vpack.c.b16 %v187, %v186
    %v198 = vpack.c.b16 %v189, %v188
    %v199 = vpack.c.b16 %v191, %v190
    %v201 = vunpack.c.l.b16 %v63
    %v202 = vunpack.c.h.b16 %v63
    %v203 = vpack.c.b16 %v201, %v201
    %v204 = vpack.c.b16 %v202, %v202
    %vm205 = vcmask 64512
    %v207 = vsel %vm205, %v192, 0
    %v210 = vsel %vm205, %v193, 0
    %v213 = vsel %vm205, %v194, 0
    %v216 = vsel %vm205, %v195, 0
    %v219 = vsel %vm205, %v196, 0
    %v222 = vsel %vm205, %v197, 0
    %v225 = vsel %vm205, %v198, 0
    %v228 = vsel %vm205, %v199, 0
    %vm230 = vcmask 1043456
    %v232 = vsel %vm230, %v203, 0
    %v235 = vsel %vm230, %v204, 0
    %237 = vmatpush.bf16.msra.mxu0 0
    %238 = vmatpush.bf16.msra.mxu0 0
    %239 = vmatpush.bf16.msra.mxu0 0
    %240 = vmatpush.bf16.msra.mxu0 0
    %241 = vmatpush.bf16.msra.mxu0 0
    %242 = vmatpush.bf16.msra.mxu0 0
    %243 = vmatpush.bf16.msra.mxu0 0
    %244 = vmatpush.bf16.msra.mxu0 %v232
    %245 = vmatmul.bf16.gmra.mxu0 %v207
    %v246 = vpop.f32.mrf.mxu0
    %v247 = vadd.f32 %v83, %v246
    %v248 = vpop.f32.mrf.mxu0
    %v249 = vadd.f32 %v88, %v248
    %250 = vmatmul.bf16.gmra.mxu0 %v210
    %v251 = vpop.f32.mrf.mxu0
    %v252 = vadd.f32 %v93, %v251
    %v253 = vpop.f32.mrf.mxu0
    %v254 = vadd.f32 %v98, %v253
    %255 = vmatmul.bf16.gmra.mxu0 %v213
    %v256 = vpop.f32.mrf.mxu0
    %v257 = vadd.f32 %v103, %v256
    %v258 = vpop.f32.mrf.mxu0
    %v259 = vadd.f32 %v108, %v258
    %260 = vmatmul.bf16.gmra.mxu0 %v216
    %v261 = vpop.f32.mrf.mxu0
    %v262 = vadd.f32 %v113, %v261
    %v263 = vpop.f32.mrf.mxu0
    %v264 = vadd.f32 %v118, %v263
    %265 = vmatmul.bf16.gmra.mxu0 %v219
    %v266 = vpop.f32.mrf.mxu0
    %v267 = vadd.f32 %v123, %v266
    %v268 = vpop.f32.mrf.mxu0
    %v269 = vadd.f32 %v128, %v268
    %270 = vmatmul.bf16.gmra.mxu0 %v222
    %v271 = vpop.f32.mrf.mxu0
    %v272 = vadd.f32 %v133, %v271
    %v273 = vpop.f32.mrf.mxu0
    %v274 = vadd.f32 %v138, %v273
    %275 = vmatmul.bf16.gmra.mxu0 %v225
    %v276 = vpop.f32.mrf.mxu0
    %v277 = vadd.f32 %v143, %v276
    %v278 = vpop.f32.mrf.mxu0
    %v279 = vadd.f32 %v148, %v278
    %280 = vmatmul.bf16.gmra.mxu0 %v228
    %v281 = vpop.f32.mrf.mxu0
    %v282 = vadd.f32 %v153, %v281
    %v283 = vpop.f32.mrf.mxu0
    %v284 = vadd.f32 %v158, %v283
    %285 = vdwg.mxu0
    %286 = vmatpush.bf16.msra.mxu0 0
    %287 = vmatpush.bf16.msra.mxu0 0
    %288 = vmatpush.bf16.msra.mxu0 0
    %289 = vmatpush.bf16.msra.mxu0 0
    %290 = vmatpush.bf16.msra.mxu0 0
    %291 = vmatpush.bf16.msra.mxu0 0
    %292 = vmatpush.bf16.msra.mxu0 0
    %293 = vmatpush.bf16.msra.mxu0 %v235
    %294 = vmatmul.bf16.gmra.mxu0 %v207
    %v295 = vpop.f32.mrf.mxu0
    %v296 = vadd.f32 %v83, %v295
    %v297 = vpop.f32.mrf.mxu0
    %v298 = vadd.f32 %v88, %v297
    %299 = vmatmul.bf16.gmra.mxu0 %v210
    %v300 = vpop.f32.mrf.mxu0
    %v301 = vadd.f32 %v93, %v300
    %v302 = vpop.f32.mrf.mxu0
    %v303 = vadd.f32 %v98, %v302
    %304 = vmatmul.bf16.gmra.mxu0 %v213
    %v305 = vpop.f32.mrf.mxu0
    %v306 = vadd.f32 %v103, %v305
    %v307 = vpop.f32.mrf.mxu0
    %v308 = vadd.f32 %v108, %v307
    %309 = vmatmul.bf16.gmra.mxu0 %v216
    %v310 = vpop.f32.mrf.mxu0
    %v311 = vadd.f32 %v113, %v310
    %v312 = vpop.f32.mrf.mxu0
    %v313 = vadd.f32 %v118, %v312
    %314 = vmatmul.bf16.gmra.mxu0 %v219
    %v315 = vpop.f32.mrf.mxu0
    %v316 = vadd.f32 %v123, %v315
    %v317 = vpop.f32.mrf.mxu0
    %v318 = vadd.f32 %v128, %v317
    %319 = vmatmul.bf16.gmra.mxu0 %v222
    %v320 = vpop.f32.mrf.mxu0
    %v321 = vadd.f32 %v133, %v320
    %v322 = vpop.f32.mrf.mxu0
    %v323 = vadd.f32 %v138, %v322
    %324 = vmatmul.bf16.gmra.mxu0 %v225
    %v325 = vpop.f32.mrf.mxu0
    %v326 = vadd.f32 %v143, %v325
    %v327 = vpop.f32.mrf.mxu0
    %v328 = vadd.f32 %v148, %v327
    %329 = vmatmul.bf16.gmra.mxu0 %v228
    %v330 = vpop.f32.mrf.mxu0
    %v331 = vadd.f32 %v153, %v330
    %v332 = vpop.f32.mrf.mxu0
    %v333 = vadd.f32 %v158, %v332
    %334 = vdwg.mxu0
    %v335 = vlaneseq
    %v336 = vand.u32 %v335, 127
    %v337 = vadd.s32 %v336, 128
    %vm338 = vcmp.lt.s32.totalorder %v336, 0
    %v339 = vsub.s32 0, %v336
    %v340 = vsel %vm338, %v339, %v336
    %v341 = vshrl.u32 %v340, 7
    %v342 = vand.u32 %v340, 127
    %v343 = vsub.s32 0, %v342
    %v344 = vsel %vm338, %v343, %v342
    %vm345 = vcmp.lt.s32.totalorder %v337, 0
    %v346 = vsub.s32 0, %v337
    %v347 = vsel %vm345, %v346, %v337
    %v348 = vshrl.u32 %v347, 7
    %v349 = vand.u32 %v347, 127
    %v350 = vsub.s32 0, %v349
    %v351 = vsel %vm345, %v350, %v349
    %vm352 = vcmp.ne.s32.totalorder %v344, 0
    %vm353 = vcmp.ne.s32.totalorder %v351, 0
    %vm354 = vcmp.lt.s32.totalorder %v344, 0
    %vm355 = vcmp.lt.s32.totalorder %v351, 0
    %vm356 = vmand %vm354, %vm352
    %vm357 = vmand %vm355, %vm353
    %v358 = vadd.s32 %v344, 128
    %v359 = vadd.s32 %v351, 128
    %v360 = vsel %vm356, %v358, %v344
    %v361 = vsel %vm357, %v359, %v351
    %vm362 = vcmp.ge.s32.totalorder %v360, 1
    %vm363 = vcmp.ge.s32.totalorder %v361, 1
    %vm364 = vcmp.ge.s32.totalorder %v360, 2
    %vm365 = vcmp.ge.s32.totalorder %v361, 2
    %v366 = vpack.c.bf16 %v44, %v43
    %v367 = vpack.c.bf16 %v46, %v45
    %368 = vrot.lane.b32.xlu0 %v43, 1
    %v369 = vpop.permute.xlu0 %368
    %370 = vrot.lane.b32.xlu0 %v45, 1
    %v371 = vpop.permute.xlu0 %370
    %372 = vrot.lane.b32.xlu0 %v44, 1
    %v373 = vpop.permute.xlu0 %372
    %374 = vrot.lane.b32.xlu0 %v46, 1
    %v375 = vpop.permute.xlu0 %374
    %vm376 = vcmp.lt.s32.totalorder %v336, 1
    %v377 = vsel %vm376, %v369, %v373
    %v378 = vsel %vm376, %v371, %v375
    %v379 = vsel %vm376, %v373, %v369
    %v380 = vsel %vm376, %v375, %v371
    %v381 = vsel %vm362, %v379, 0.0
    %v382 = vsel %vm363, %v377, 0.0
    %v383 = vsel %vm362, %v380, 0.0
    %v384 = vsel %vm363, %v378, 0.0
    %v385 = vpack.c.bf16 %v382, %v381
    %v386 = vpack.c.bf16 %v384, %v383
    %v389 = vunpack.c.l.b16 %v385
    %v390 = vunpack.c.h.b16 %v385
    %v391 = vunpack.c.l.b16 %v386
    %v392 = vunpack.c.h.b16 %v386
    %v393 = vpack.c.b16 %v391, %v389
    %v394 = vpack.c.b16 %v392, %v390
    %v399 = vunpack.c.l.b16 %v366
    %v400 = vunpack.c.h.b16 %v366
    %v401 = vunpack.c.l.b16 %v367
    %v402 = vunpack.c.h.b16 %v367
    %v403 = vpack.c.b16 %v401, %v399
    %v404 = vpack.c.b16 %v402, %v400
    %v407 = vld [vmem:[%s2] sm:$0xf]
    %v408 = vld [vmem:[%s2 + $0x4] sm:$0xf]
    %v409 = vld [vmem:[%s2 + $0x8] sm:$0xf]
    %v410 = vld [vmem:[%s2 + $0xc] sm:$0xf]
    %v415 = vunpack.c.l.b16 %v407
    %v416 = vunpack.c.l.b16 %v408
    %v417 = vunpack.c.l.b16 %v409
    %v418 = vunpack.c.l.b16 %v410
    %v419 = vpack.c.b16 %v416, %v415
    %v420 = vpack.c.b16 %v418, %v417
    %vm421 = vcmask 261120
    %v423 = vsel %vm421, %v419, 0
    %v426 = vsel %vm421, %v420, 0
    %428 = vmatpush.bf16.msra.mxu0 0
    %429 = vmatpush.bf16.msra.mxu0 0
    %430 = vmatpush.bf16.msra.mxu0 0
    %431 = vmatpush.bf16.msra.mxu0 0
    %432 = vmatpush.bf16.msra.mxu0 0
    %433 = vmatpush.bf16.msra.mxu0 0
    %434 = vmatpush.bf16.msra.mxu0 %v403
    %435 = vmatpush.bf16.msra.mxu0 %v393
    %436 = vmatmul.bf16.gmra.mxu0 %v423
    %v437 = vpop.f32.mrf.mxu0
    %v438 = vadd.f32 %v247, %v437
    %v439 = vpop.f32.mrf.mxu0
    %v440 = vadd.f32 %v249, %v439
    %441 = vmatmul.bf16.gmra.mxu0 %v426
    %v442 = vpop.f32.mrf.mxu0
    %v443 = vadd.f32 %v252, %v442
    %v444 = vpop.f32.mrf.mxu0
    %v445 = vadd.f32 %v254, %v444
    %446 = vdwg.mxu0
    %447 = vmatpush.bf16.msra.mxu0 0
    %448 = vmatpush.bf16.msra.mxu0 0
    %449 = vmatpush.bf16.msra.mxu0 0
    %450 = vmatpush.bf16.msra.mxu0 0
    %451 = vmatpush.bf16.msra.mxu0 0
    %452 = vmatpush.bf16.msra.mxu0 0
    %453 = vmatpush.bf16.msra.mxu0 %v404
    %454 = vmatpush.bf16.msra.mxu0 %v394
    %455 = vmatmul.bf16.gmra.mxu0 %v423
    %v456 = vpop.f32.mrf.mxu0
    %v457 = vadd.f32 %v296, %v456
    %v458 = vpop.f32.mrf.mxu0
    %v459 = vadd.f32 %v298, %v458
    %460 = vmatmul.bf16.gmra.mxu0 %v426
    %v461 = vpop.f32.mrf.mxu0
    %v462 = vadd.f32 %v301, %v461
    %v463 = vpop.f32.mrf.mxu0
    %v464 = vadd.f32 %v303, %v463
    %465 = vdwg.mxu0
    %v466 = vtanh.pop %v438
    %v467 = vtanh.pop %v457
    %v468 = vtanh.pop %v440
    %v469 = vtanh.pop %v459
    %v470 = vxor.u32 %v443, 2147483648
    %v471 = vxor.u32 %v462, 2147483648
    %v472 = vxor.u32 %v445, 2147483648
    %v473 = vxor.u32 %v464, 2147483648
    %v474 = vmul.f32 %v470, 1.442695
    %v475 = vpow.pop %v474
    %v476 = vmul.f32 %v471, 1.442695
    %v477 = vpow.pop %v476
    %v478 = vmul.f32 %v472, 1.442695
    %v479 = vpow.pop %v478
    %v480 = vmul.f32 %v473, 1.442695
    %v481 = vpow.pop %v480
    %v482 = vadd.f32 %v475, 1.0
    %v483 = vadd.f32 %v477, 1.0
    %v484 = vadd.f32 %v479, 1.0
    %v485 = vadd.f32 %v481, 1.0
    %v486 = vrcp.pop %v482
    %v487 = vmul.f32 %v482, %v486
    %v488 = vsub.f32 1.0, %v487
    %v489 = vmul.f32 %v486, %v488
    %v490 = vadd.f32 %v486, %v489
    %vm491 = vweird.f32 %v482
    %vm492 = vweird.f32 %v486
    %vm493 = vmor %vm491, %vm492
    %v494 = vsel %vm493, %v486, %v490
    %v495 = vand.u32 2147483647, %v482
    %vm496 = vcmp.eq.f32.partialorder %v495, 8.507059e+37
    %v497 = vand.u32 %v482, 2147483648
    %v498 = vor.u32 1.1754944e-38, %v497
    %v499 = vsel %vm496, %v498, %v494
    %v500 = vmul.f32 1.0, %v499
    %v501 = vrcp.pop %v483
    %v502 = vmul.f32 %v483, %v501
    %v503 = vsub.f32 1.0, %v502
    %v504 = vmul.f32 %v501, %v503
    %v505 = vadd.f32 %v501, %v504
    %vm506 = vweird.f32 %v483
    %vm507 = vweird.f32 %v501
    %vm508 = vmor %vm506, %vm507
    %v509 = vsel %vm508, %v501, %v505
    %v510 = vand.u32 2147483647, %v483
    %vm511 = vcmp.eq.f32.partialorder %v510, 8.507059e+37
    %v512 = vand.u32 %v483, 2147483648
    %v513 = vor.u32 1.1754944e-38, %v512
    %v514 = vsel %vm511, %v513, %v509
    %v515 = vmul.f32 1.0, %v514
    %v516 = vrcp.pop %v484
    %v517 = vmul.f32 %v484, %v516
    %v518 = vsub.f32 1.0, %v517
    %v519 = vmul.f32 %v516, %v518
    %v520 = vadd.f32 %v516, %v519
    %vm521 = vweird.f32 %v484
    %vm522 = vweird.f32 %v516
    %vm523 = vmor %vm521, %vm522
    %v524 = vsel %vm523, %v516, %v520
    %v525 = vand.u32 2147483647, %v484
    %vm526 = vcmp.eq.f32.partialorder %v525, 8.507059e+37
    %v527 = vand.u32 %v484, 2147483648
    %v528 = vor.u32 1.1754944e-38, %v527
    %v529 = vsel %vm526, %v528, %v524
    %v530 = vmul.f32 1.0, %v529
    %v531 = vrcp.pop %v485
    %v532 = vmul.f32 %v485, %v531
    %v533 = vsub.f32 1.0, %v532
    %v534 = vmul.f32 %v531, %v533
    %v535 = vadd.f32 %v531, %v534
    %vm536 = vweird.f32 %v485
    %vm537 = vweird.f32 %v531
    %vm538 = vmor %vm536, %vm537
    %v539 = vsel %vm538, %v531, %v535
    %v540 = vand.u32 2147483647, %v485
    %vm541 = vcmp.eq.f32.partialorder %v540, 8.507059e+37
    %v542 = vand.u32 %v485, 2147483648
    %v543 = vor.u32 1.1754944e-38, %v542
    %v544 = vsel %vm541, %v543, %v539
    %v545 = vmul.f32 1.0, %v544
    %v546 = vmul.f32 %v466, %v500
    %v547 = vmul.f32 %v467, %v515
    %v548 = vmul.f32 %v468, %v530
    %v549 = vmul.f32 %v469, %v545
    %v550 = vpack.c.bf16 %v548, %v546
    %v551 = vpack.c.bf16 %v549, %v547
    %v552 = vld [vmem:[%s5] sm:$0xf]
    %v553 = vld [vmem:[%s5 + $0x4] sm:$0xf]
    %v554 = vld [vmem:[%s5 + $0x8] sm:$0xf]
    %v555 = vld [vmem:[%s5 + $0xc] sm:$0xf]
    %v560 = vunpack.c.l.b16 %v552
    %v561 = vunpack.c.l.b16 %v553
    %v562 = vunpack.c.l.b16 %v554
    %v563 = vunpack.c.l.b16 %v555
    %v564 = vpack.c.b16 %v561, %v560
    %v565 = vpack.c.b16 %v563, %v562
    %vm566 = vcmask 130048
    %v568 = vsel %vm566, %v564, 0
    %v571 = vsel %vm566, %v565, 0
    %573 = vmatpush.bf16.msra.mxu0 0
    %574 = vmatpush.bf16.msra.mxu0 0
    %575 = vmatpush.bf16.msra.mxu0 0
    %576 = vmatpush.bf16.msra.mxu0 0
    %577 = vmatpush.bf16.msra.mxu0 0
    %578 = vmatpush.bf16.msra.mxu0 0
    %579 = vmatpush.bf16.msra.mxu0 0
    %580 = vmatpush.bf16.msra.mxu0 %v550
    %581 = vmatmul.bf16.gmra.mxu0 %v568
    %v582 = vpop.f32.mrf.mxu0
    %v583 = vadd.f32 0.0, %v582
    %v584 = vpop.f32.mrf.mxu0
    %v585 = vadd.f32 0.0, %v584
    %586 = vmatmul.bf16.gmra.mxu0 %v571
    %v587 = vpop.f32.mrf.mxu0
    %v588 = vadd.f32 0.0, %v587
    %v589 = vpop.f32.mrf.mxu0
    %v590 = vadd.f32 0.0, %v589
    %591 = vdwg.mxu0
    %592 = vmatpush.bf16.msra.mxu0 0
    %593 = vmatpush.bf16.msra.mxu0 0
    %594 = vmatpush.bf16.msra.mxu0 0
    %595 = vmatpush.bf16.msra.mxu0 0
    %596 = vmatpush.bf16.msra.mxu0 0
    %597 = vmatpush.bf16.msra.mxu0 0
    %598 = vmatpush.bf16.msra.mxu0 0
    %599 = vmatpush.bf16.msra.mxu0 %v551
    %600 = vmatmul.bf16.gmra.mxu0 %v568
    %v601 = vpop.f32.mrf.mxu0
    %v602 = vadd.f32 0.0, %v601
    %v603 = vpop.f32.mrf.mxu0
    %v604 = vadd.f32 0.0, %v603
    %605 = vmatmul.bf16.gmra.mxu0 %v571
    %v606 = vpop.f32.mrf.mxu0
    %v607 = vadd.f32 0.0, %v606
    %v608 = vpop.f32.mrf.mxu0
    %v609 = vadd.f32 0.0, %v608
    %610 = vdwg.mxu0
    %v611 = vadd.f32 %v583, 0.0
    %v612 = vadd.f32 %v602, 0.0
    %v613 = vadd.f32 %v585, 0.0
    %v614 = vadd.f32 %v604, 0.0
    %v615 = vld [vmem:[%s6] sm:$0xff]
    %v616 = vld [vmem:[%s6 + $0x8] sm:$0xff]
    %618 = vset.pattern.permute.xlu0 0
    %619 = vperm.xlu0 %618, %v615
    %v620 = vpop.permute.xlu0 %619
    %623 = vset.pattern.permute.xlu0 0
    %624 = vperm.xlu0 %623, %v616
    %v625 = vpop.permute.xlu0 %624
    %v627 = vadd.f32 %v588, %v620
    %v628 = vadd.f32 %v607, %v620
    %v629 = vadd.f32 %v590, %v625
    %v630 = vadd.f32 %v609, %v625
    %v631 = vadd.f32 %v627, %v43
    %v632 = vadd.f32 %v628, %v44
    %v633 = vadd.f32 %v629, %v45
    %v634 = vadd.f32 %v630, %v46
    %v635 = vpack.c.bf16 %v632, %v631
    %v636 = vpack.c.bf16 %v634, %v633
    %637 = vrot.lane.b32.xlu0 %v631, 2
    %v638 = vpop.permute.xlu0 %637
    %639 = vrot.lane.b32.xlu0 %v633, 2
    %v640 = vpop.permute.xlu0 %639
    %641 = vrot.lane.b32.xlu0 %v632, 2
    %v642 = vpop.permute.xlu0 %641
    %643 = vrot.lane.b32.xlu0 %v634, 2
    %v644 = vpop.permute.xlu0 %643
    %vm645 = vcmp.lt.s32.totalorder %v336, 2
    %v646 = vsel %vm645, %v638, %v642
    %v647 = vsel %vm645, %v640, %v644
    %v648 = vsel %vm645, %v642, %v638
    %v649 = vsel %vm645, %v644, %v640
    %v650 = vsel %vm364, %v648, 0.0
    %v651 = vsel %vm365, %v646, 0.0
    %v652 = vsel %vm364, %v649, 0.0
    %v653 = vsel %vm365, %v647, 0.0
    %v654 = vpack.c.bf16 %v651, %v650
    %v655 = vpack.c.bf16 %v653, %v652
    %v658 = vunpack.c.l.b16 %v654
    %v659 = vunpack.c.h.b16 %v654
    %v660 = vunpack.c.l.b16 %v655
    %v661 = vunpack.c.h.b16 %v655
    %v662 = vpack.c.b16 %v660, %v658
    %v663 = vpack.c.b16 %v661, %v659
    %v668 = vunpack.c.l.b16 %v635
    %v669 = vunpack.c.h.b16 %v635
    %v670 = vunpack.c.l.b16 %v636
    %v671 = vunpack.c.h.b16 %v636
    %v672 = vpack.c.b16 %v670, %v668
    %v673 = vpack.c.b16 %v671, %v669
    %s676 = scalar_lea.vmem %s2, 16
    %v677 = vld [vmem:[%s676] sm:$0xf]
    %v678 = vld [vmem:[%s676 + $0x4] sm:$0xf]
    %v679 = vld [vmem:[%s676 + $0x8] sm:$0xf]
    %v680 = vld [vmem:[%s676 + $0xc] sm:$0xf]
    %v685 = vunpack.c.l.b16 %v677
    %v686 = vunpack.c.l.b16 %v678
    %v687 = vunpack.c.l.b16 %v679
    %v688 = vunpack.c.l.b16 %v680
    %v689 = vpack.c.b16 %v686, %v685
    %v690 = vpack.c.b16 %v688, %v687
    %v692 = vsel %vm421, %v689, 0
    %v695 = vsel %vm421, %v690, 0
    %697 = vmatpush.bf16.msra.mxu0 0
    %698 = vmatpush.bf16.msra.mxu0 0
    %699 = vmatpush.bf16.msra.mxu0 0
    %700 = vmatpush.bf16.msra.mxu0 0
    %701 = vmatpush.bf16.msra.mxu0 0
    %702 = vmatpush.bf16.msra.mxu0 0
    %703 = vmatpush.bf16.msra.mxu0 %v672
    %704 = vmatpush.bf16.msra.mxu0 %v662
    %705 = vmatmul.bf16.gmra.mxu0 %v692
    %v706 = vpop.f32.mrf.mxu0
    %v707 = vadd.f32 %v257, %v706
    %v708 = vpop.f32.mrf.mxu0
    %v709 = vadd.f32 %v259, %v708
    %710 = vmatmul.bf16.gmra.mxu0 %v695
    %v711 = vpop.f32.mrf.mxu0
    %v712 = vadd.f32 %v262, %v711
    %v713 = vpop.f32.mrf.mxu0
    %v714 = vadd.f32 %v264, %v713
    %715 = vdwg.mxu0
    %716 = vmatpush.bf16.msra.mxu0 0
    %717 = vmatpush.bf16.msra.mxu0 0
    %718 = vmatpush.bf16.msra.mxu0 0
    %719 = vmatpush.bf16.msra.mxu0 0
    %720 = vmatpush.bf16.msra.mxu0 0
    %721 = vmatpush.bf16.msra.mxu0 0
    %722 = vmatpush.bf16.msra.mxu0 %v673
    %723 = vmatpush.bf16.msra.mxu0 %v663
    %724 = vmatmul.bf16.gmra.mxu0 %v692
    %v725 = vpop.f32.mrf.mxu0
    %v726 = vadd.f32 %v306, %v725
    %v727 = vpop.f32.mrf.mxu0
    %v728 = vadd.f32 %v308, %v727
    %729 = vmatmul.bf16.gmra.mxu0 %v695
    %v730 = vpop.f32.mrf.mxu0
    %v731 = vadd.f32 %v311, %v730
    %v732 = vpop.f32.mrf.mxu0
    %v733 = vadd.f32 %v313, %v732
    %734 = vdwg.mxu0
    %v735 = vtanh.pop %v707
    %v736 = vtanh.pop %v726
    %v737 = vtanh.pop %v709
    %v738 = vtanh.pop %v728
    %v739 = vxor.u32 %v712, 2147483648
    %v740 = vxor.u32 %v731, 2147483648
    %v741 = vxor.u32 %v714, 2147483648
    %v742 = vxor.u32 %v733, 2147483648
    %v743 = vmul.f32 %v739, 1.442695
    %v744 = vpow.pop %v743
    %v745 = vmul.f32 %v740, 1.442695
    %v746 = vpow.pop %v745
    %v747 = vmul.f32 %v741, 1.442695
    %v748 = vpow.pop %v747
    %v749 = vmul.f32 %v742, 1.442695
    %v750 = vpow.pop %v749
    %v751 = vadd.f32 %v744, 1.0
    %v752 = vadd.f32 %v746, 1.0
    %v753 = vadd.f32 %v748, 1.0
    %v754 = vadd.f32 %v750, 1.0
    %v755 = vrcp.pop %v751
    %v756 = vmul.f32 %v751, %v755
    %v757 = vsub.f32 1.0, %v756
    %v758 = vmul.f32 %v755, %v757
    %v759 = vadd.f32 %v755, %v758
    %vm760 = vweird.f32 %v751
    %vm761 = vweird.f32 %v755
    %vm762 = vmor %vm760, %vm761
    %v763 = vsel %vm762, %v755, %v759
    %v764 = vand.u32 2147483647, %v751
    %vm765 = vcmp.eq.f32.partialorder %v764, 8.507059e+37
    %v766 = vand.u32 %v751, 2147483648
    %v767 = vor.u32 1.1754944e-38, %v766
    %v768 = vsel %vm765, %v767, %v763
    %v769 = vmul.f32 1.0, %v768
    %v770 = vrcp.pop %v752
    %v771 = vmul.f32 %v752, %v770
    %v772 = vsub.f32 1.0, %v771
    %v773 = vmul.f32 %v770, %v772
    %v774 = vadd.f32 %v770, %v773
    %vm775 = vweird.f32 %v752
    %vm776 = vweird.f32 %v770
    %vm777 = vmor %vm775, %vm776
    %v778 = vsel %vm777, %v770, %v774
    %v779 = vand.u32 2147483647, %v752
    %vm780 = vcmp.eq.f32.partialorder %v779, 8.507059e+37
    %v781 = vand.u32 %v752, 2147483648
    %v782 = vor.u32 1.1754944e-38, %v781
    %v783 = vsel %vm780, %v782, %v778
    %v784 = vmul.f32 1.0, %v783
    %v785 = vrcp.pop %v753
    %v786 = vmul.f32 %v753, %v785
    %v787 = vsub.f32 1.0, %v786
    %v788 = vmul.f32 %v785, %v787
    %v789 = vadd.f32 %v785, %v788
    %vm790 = vweird.f32 %v753
    %vm791 = vweird.f32 %v785
    %vm792 = vmor %vm790, %vm791
    %v793 = vsel %vm792, %v785, %v789
    %v794 = vand.u32 2147483647, %v753
    %vm795 = vcmp.eq.f32.partialorder %v794, 8.507059e+37
    %v796 = vand.u32 %v753, 2147483648
    %v797 = vor.u32 1.1754944e-38, %v796
    %v798 = vsel %vm795, %v797, %v793
    %v799 = vmul.f32 1.0, %v798
    %v800 = vrcp.pop %v754
    %v801 = vmul.f32 %v754, %v800
    %v802 = vsub.f32 1.0, %v801
    %v803 = vmul.f32 %v800, %v802
    %v804 = vadd.f32 %v800, %v803
    %vm805 = vweird.f32 %v754
    %vm806 = vweird.f32 %v800
    %vm807 = vmor %vm805, %vm806
    %v808 = vsel %vm807, %v800, %v804
    %v809 = vand.u32 2147483647, %v754
    %vm810 = vcmp.eq.f32.partialorder %v809, 8.507059e+37
    %v811 = vand.u32 %v754, 2147483648
    %v812 = vor.u32 1.1754944e-38, %v811
    %v813 = vsel %vm810, %v812, %v808
    %v814 = vmul.f32 1.0, %v813
    %v815 = vmul.f32 %v735, %v769
    %v816 = vmul.f32 %v736, %v784
    %v817 = vmul.f32 %v737, %v799
    %v818 = vmul.f32 %v738, %v814
    %v819 = vpack.c.bf16 %v817, %v815
    %v820 = vpack.c.bf16 %v818, %v816
    %s821 = scalar_lea.vmem %s5, 16
    %v822 = vld [vmem:[%s821] sm:$0xf]
    %v823 = vld [vmem:[%s821 + $0x4] sm:$0xf]
    %v824 = vld [vmem:[%s821 + $0x8] sm:$0xf]
    %v825 = vld [vmem:[%s821 + $0xc] sm:$0xf]
    %v830 = vunpack.c.l.b16 %v822
    %v831 = vunpack.c.l.b16 %v823
    %v832 = vunpack.c.l.b16 %v824
    %v833 = vunpack.c.l.b16 %v825
    %v834 = vpack.c.b16 %v831, %v830
    %v835 = vpack.c.b16 %v833, %v832
    %v837 = vsel %vm566, %v834, 0
    %v840 = vsel %vm566, %v835, 0
    %842 = vmatpush.bf16.msra.mxu0 0
    %843 = vmatpush.bf16.msra.mxu0 0
    %844 = vmatpush.bf16.msra.mxu0 0
    %845 = vmatpush.bf16.msra.mxu0 0
    %846 = vmatpush.bf16.msra.mxu0 0
    %847 = vmatpush.bf16.msra.mxu0 0
    %848 = vmatpush.bf16.msra.mxu0 0
    %849 = vmatpush.bf16.msra.mxu0 %v819
    %850 = vmatmul.bf16.gmra.mxu0 %v837
    %v851 = vpop.f32.mrf.mxu0
    %v852 = vadd.f32 0.0, %v851
    %v853 = vpop.f32.mrf.mxu0
    %v854 = vadd.f32 0.0, %v853
    %855 = vmatmul.bf16.gmra.mxu0 %v840
    %v856 = vpop.f32.mrf.mxu0
    %v857 = vadd.f32 0.0, %v856
    %v858 = vpop.f32.mrf.mxu0
    %v859 = vadd.f32 0.0, %v858
    %860 = vdwg.mxu0
    %861 = vmatpush.bf16.msra.mxu0 0
    %862 = vmatpush.bf16.msra.mxu0 0
    %863 = vmatpush.bf16.msra.mxu0 0
    %864 = vmatpush.bf16.msra.mxu0 0
    %865 = vmatpush.bf16.msra.mxu0 0
    %866 = vmatpush.bf16.msra.mxu0 0
    %867 = vmatpush.bf16.msra.mxu0 0
    %868 = vmatpush.bf16.msra.mxu0 %v820
    %869 = vmatmul.bf16.gmra.mxu0 %v837
    %v870 = vpop.f32.mrf.mxu0
    %v871 = vadd.f32 0.0, %v870
    %v872 = vpop.f32.mrf.mxu0
    %v873 = vadd.f32 0.0, %v872
    %874 = vmatmul.bf16.gmra.mxu0 %v840
    %v875 = vpop.f32.mrf.mxu0
    %v876 = vadd.f32 0.0, %v875
    %v877 = vpop.f32.mrf.mxu0
    %v878 = vadd.f32 0.0, %v877
    %879 = vdwg.mxu0
    %v880 = vadd.f32 %v611, %v852
    %v881 = vadd.f32 %v612, %v871
    %v882 = vadd.f32 %v613, %v854
    %v883 = vadd.f32 %v614, %v873
    %s884 = scalar_lea.vmem %s6, 16
    %v885 = vld [vmem:[%s884] sm:$0xff]
    %v886 = vld [vmem:[%s884 + $0x8] sm:$0xff]
    %888 = vset.pattern.permute.xlu0 0
    %889 = vperm.xlu0 %888, %v885
    %v890 = vpop.permute.xlu0 %889
    %893 = vset.pattern.permute.xlu0 0
    %894 = vperm.xlu0 %893, %v886
    %v895 = vpop.permute.xlu0 %894
    %v897 = vadd.f32 %v857, %v890
    %v898 = vadd.f32 %v876, %v890
    %v899 = vadd.f32 %v859, %v895
    %v900 = vadd.f32 %v878, %v895
    %v901 = vadd.f32 %v897, %v631
    %v902 = vadd.f32 %v898, %v632
    %v903 = vadd.f32 %v899, %v633
    %v904 = vadd.f32 %v900, %v634
    %v905 = vpack.c.bf16 %v902, %v901
    %v906 = vpack.c.bf16 %v904, %v903
    %907 = vrot.lane.b32.xlu0 %v901, 1
    %v908 = vpop.permute.xlu0 %907
    %909 = vrot.lane.b32.xlu0 %v903, 1
    %v910 = vpop.permute.xlu0 %909
    %911 = vrot.lane.b32.xlu0 %v902, 1
    %v912 = vpop.permute.xlu0 %911
    %913 = vrot.lane.b32.xlu0 %v904, 1
    %v914 = vpop.permute.xlu0 %913
    %v915 = vsel %vm376, %v908, %v912
    %v916 = vsel %vm376, %v910, %v914
    %v917 = vsel %vm376, %v912, %v908
    %v918 = vsel %vm376, %v914, %v910
    %v919 = vsel %vm362, %v917, 0.0
    %v920 = vsel %vm363, %v915, 0.0
    %v921 = vsel %vm362, %v918, 0.0
    %v922 = vsel %vm363, %v916, 0.0
    %v923 = vpack.c.bf16 %v920, %v919
    %v924 = vpack.c.bf16 %v922, %v921
    %v927 = vunpack.c.l.b16 %v923
    %v928 = vunpack.c.h.b16 %v923
    %v929 = vunpack.c.l.b16 %v924
    %v930 = vunpack.c.h.b16 %v924
    %v931 = vpack.c.b16 %v929, %v927
    %v932 = vpack.c.b16 %v930, %v928
    %v937 = vunpack.c.l.b16 %v905
    %v938 = vunpack.c.h.b16 %v905
    %v939 = vunpack.c.l.b16 %v906
    %v940 = vunpack.c.h.b16 %v906
    %v941 = vpack.c.b16 %v939, %v937
    %v942 = vpack.c.b16 %v940, %v938
    %s945 = scalar_lea.vmem %s2, 32
    %v946 = vld [vmem:[%s945] sm:$0xf]
    %v947 = vld [vmem:[%s945 + $0x4] sm:$0xf]
    %v948 = vld [vmem:[%s945 + $0x8] sm:$0xf]
    %v949 = vld [vmem:[%s945 + $0xc] sm:$0xf]
    %v954 = vunpack.c.l.b16 %v946
    %v955 = vunpack.c.l.b16 %v947
    %v956 = vunpack.c.l.b16 %v948
    %v957 = vunpack.c.l.b16 %v949
    %v958 = vpack.c.b16 %v955, %v954
    %v959 = vpack.c.b16 %v957, %v956
    %v961 = vsel %vm421, %v958, 0
    %v964 = vsel %vm421, %v959, 0
    %966 = vmatpush.bf16.msra.mxu0 0
    %967 = vmatpush.bf16.msra.mxu0 0
    %968 = vmatpush.bf16.msra.mxu0 0
    %969 = vmatpush.bf16.msra.mxu0 0
    %970 = vmatpush.bf16.msra.mxu0 0
    %971 = vmatpush.bf16.msra.mxu0 0
    %972 = vmatpush.bf16.msra.mxu0 %v941
    %973 = vmatpush.bf16.msra.mxu0 %v931
    %974 = vmatmul.bf16.gmra.mxu0 %v961
    %v975 = vpop.f32.mrf.mxu0
    %v976 = vadd.f32 %v267, %v975
    %v977 = vpop.f32.mrf.mxu0
    %v978 = vadd.f32 %v269, %v977
    %979 = vmatmul.bf16.gmra.mxu0 %v964
    %v980 = vpop.f32.mrf.mxu0
    %v981 = vadd.f32 %v272, %v980
    %v982 = vpop.f32.mrf.mxu0
    %v983 = vadd.f32 %v274, %v982
    %984 = vdwg.mxu0
    %985 = vmatpush.bf16.msra.mxu0 0
    %986 = vmatpush.bf16.msra.mxu0 0
    %987 = vmatpush.bf16.msra.mxu0 0
    %988 = vmatpush.bf16.msra.mxu0 0
    %989 = vmatpush.bf16.msra.mxu0 0
    %990 = vmatpush.bf16.msra.mxu0 0
    %991 = vmatpush.bf16.msra.mxu0 %v942
    %992 = vmatpush.bf16.msra.mxu0 %v932
    %993 = vmatmul.bf16.gmra.mxu0 %v961
    %v994 = vpop.f32.mrf.mxu0
    %v995 = vadd.f32 %v316, %v994
    %v996 = vpop.f32.mrf.mxu0
    %v997 = vadd.f32 %v318, %v996
    %998 = vmatmul.bf16.gmra.mxu0 %v964
    %v999 = vpop.f32.mrf.mxu0
    %v1000 = vadd.f32 %v321, %v999
    %v1001 = vpop.f32.mrf.mxu0
    %v1002 = vadd.f32 %v323, %v1001
    %1003 = vdwg.mxu0
    %v1004 = vtanh.pop %v976
    %v1005 = vtanh.pop %v995
    %v1006 = vtanh.pop %v978
    %v1007 = vtanh.pop %v997
    %v1008 = vxor.u32 %v981, 2147483648
    %v1009 = vxor.u32 %v1000, 2147483648
    %v1010 = vxor.u32 %v983, 2147483648
    %v1011 = vxor.u32 %v1002, 2147483648
    %v1012 = vmul.f32 %v1008, 1.442695
    %v1013 = vpow.pop %v1012
    %v1014 = vmul.f32 %v1009, 1.442695
    %v1015 = vpow.pop %v1014
    %v1016 = vmul.f32 %v1010, 1.442695
    %v1017 = vpow.pop %v1016
    %v1018 = vmul.f32 %v1011, 1.442695
    %v1019 = vpow.pop %v1018
    %v1020 = vadd.f32 %v1013, 1.0
    %v1021 = vadd.f32 %v1015, 1.0
    %v1022 = vadd.f32 %v1017, 1.0
    %v1023 = vadd.f32 %v1019, 1.0
    %v1024 = vrcp.pop %v1020
    %v1025 = vmul.f32 %v1020, %v1024
    %v1026 = vsub.f32 1.0, %v1025
    %v1027 = vmul.f32 %v1024, %v1026
    %v1028 = vadd.f32 %v1024, %v1027
    %vm1029 = vweird.f32 %v1020
    %vm1030 = vweird.f32 %v1024
    %vm1031 = vmor %vm1029, %vm1030
    %v1032 = vsel %vm1031, %v1024, %v1028
    %v1033 = vand.u32 2147483647, %v1020
    %vm1034 = vcmp.eq.f32.partialorder %v1033, 8.507059e+37
    %v1035 = vand.u32 %v1020, 2147483648
    %v1036 = vor.u32 1.1754944e-38, %v1035
    %v1037 = vsel %vm1034, %v1036, %v1032
    %v1038 = vmul.f32 1.0, %v1037
    %v1039 = vrcp.pop %v1021
    %v1040 = vmul.f32 %v1021, %v1039
    %v1041 = vsub.f32 1.0, %v1040
    %v1042 = vmul.f32 %v1039, %v1041
    %v1043 = vadd.f32 %v1039, %v1042
    %vm1044 = vweird.f32 %v1021
    %vm1045 = vweird.f32 %v1039
    %vm1046 = vmor %vm1044, %vm1045
    %v1047 = vsel %vm1046, %v1039, %v1043
    %v1048 = vand.u32 2147483647, %v1021
    %vm1049 = vcmp.eq.f32.partialorder %v1048, 8.507059e+37
    %v1050 = vand.u32 %v1021, 2147483648
    %v1051 = vor.u32 1.1754944e-38, %v1050
    %v1052 = vsel %vm1049, %v1051, %v1047
    %v1053 = vmul.f32 1.0, %v1052
    %v1054 = vrcp.pop %v1022
    %v1055 = vmul.f32 %v1022, %v1054
    %v1056 = vsub.f32 1.0, %v1055
    %v1057 = vmul.f32 %v1054, %v1056
    %v1058 = vadd.f32 %v1054, %v1057
    %vm1059 = vweird.f32 %v1022
    %vm1060 = vweird.f32 %v1054
    %vm1061 = vmor %vm1059, %vm1060
    %v1062 = vsel %vm1061, %v1054, %v1058
    %v1063 = vand.u32 2147483647, %v1022
    %vm1064 = vcmp.eq.f32.partialorder %v1063, 8.507059e+37
    %v1065 = vand.u32 %v1022, 2147483648
    %v1066 = vor.u32 1.1754944e-38, %v1065
    %v1067 = vsel %vm1064, %v1066, %v1062
    %v1068 = vmul.f32 1.0, %v1067
    %v1069 = vrcp.pop %v1023
    %v1070 = vmul.f32 %v1023, %v1069
    %v1071 = vsub.f32 1.0, %v1070
    %v1072 = vmul.f32 %v1069, %v1071
    %v1073 = vadd.f32 %v1069, %v1072
    %vm1074 = vweird.f32 %v1023
    %vm1075 = vweird.f32 %v1069
    %vm1076 = vmor %vm1074, %vm1075
    %v1077 = vsel %vm1076, %v1069, %v1073
    %v1078 = vand.u32 2147483647, %v1023
    %vm1079 = vcmp.eq.f32.partialorder %v1078, 8.507059e+37
    %v1080 = vand.u32 %v1023, 2147483648
    %v1081 = vor.u32 1.1754944e-38, %v1080
    %v1082 = vsel %vm1079, %v1081, %v1077
    %v1083 = vmul.f32 1.0, %v1082
    %v1084 = vmul.f32 %v1004, %v1038
    %v1085 = vmul.f32 %v1005, %v1053
    %v1086 = vmul.f32 %v1006, %v1068
    %v1087 = vmul.f32 %v1007, %v1083
    %v1088 = vpack.c.bf16 %v1086, %v1084
    %v1089 = vpack.c.bf16 %v1087, %v1085
    %s1090 = scalar_lea.vmem %s5, 32
    %v1091 = vld [vmem:[%s1090] sm:$0xf]
    %v1092 = vld [vmem:[%s1090 + $0x4] sm:$0xf]
    %v1093 = vld [vmem:[%s1090 + $0x8] sm:$0xf]
    %v1094 = vld [vmem:[%s1090 + $0xc] sm:$0xf]
    %v1099 = vunpack.c.l.b16 %v1091
    %v1100 = vunpack.c.l.b16 %v1092
    %v1101 = vunpack.c.l.b16 %v1093
    %v1102 = vunpack.c.l.b16 %v1094
    %v1103 = vpack.c.b16 %v1100, %v1099
    %v1104 = vpack.c.b16 %v1102, %v1101
    %v1106 = vsel %vm566, %v1103, 0
    %v1109 = vsel %vm566, %v1104, 0
    %1111 = vmatpush.bf16.msra.mxu0 0
    %1112 = vmatpush.bf16.msra.mxu0 0
    %1113 = vmatpush.bf16.msra.mxu0 0
    %1114 = vmatpush.bf16.msra.mxu0 0
    %1115 = vmatpush.bf16.msra.mxu0 0
    %1116 = vmatpush.bf16.msra.mxu0 0
    %1117 = vmatpush.bf16.msra.mxu0 0
    %1118 = vmatpush.bf16.msra.mxu0 %v1088
    %1119 = vmatmul.bf16.gmra.mxu0 %v1106
    %v1120 = vpop.f32.mrf.mxu0
    %v1121 = vadd.f32 0.0, %v1120
    %v1122 = vpop.f32.mrf.mxu0
    %v1123 = vadd.f32 0.0, %v1122
    %1124 = vmatmul.bf16.gmra.mxu0 %v1109
    %v1125 = vpop.f32.mrf.mxu0
    %v1126 = vadd.f32 0.0, %v1125
    %v1127 = vpop.f32.mrf.mxu0
    %v1128 = vadd.f32 0.0, %v1127
    %1129 = vdwg.mxu0
    %1130 = vmatpush.bf16.msra.mxu0 0
    %1131 = vmatpush.bf16.msra.mxu0 0
    %1132 = vmatpush.bf16.msra.mxu0 0
    %1133 = vmatpush.bf16.msra.mxu0 0
    %1134 = vmatpush.bf16.msra.mxu0 0
    %1135 = vmatpush.bf16.msra.mxu0 0
    %1136 = vmatpush.bf16.msra.mxu0 0
    %1137 = vmatpush.bf16.msra.mxu0 %v1089
    %1138 = vmatmul.bf16.gmra.mxu0 %v1106
    %v1139 = vpop.f32.mrf.mxu0
    %v1140 = vadd.f32 0.0, %v1139
    %v1141 = vpop.f32.mrf.mxu0
    %v1142 = vadd.f32 0.0, %v1141
    %1143 = vmatmul.bf16.gmra.mxu0 %v1109
    %v1144 = vpop.f32.mrf.mxu0
    %v1145 = vadd.f32 0.0, %v1144
    %v1146 = vpop.f32.mrf.mxu0
    %v1147 = vadd.f32 0.0, %v1146
    %1148 = vdwg.mxu0
    %v1149 = vadd.f32 %v880, %v1121
    %v1150 = vadd.f32 %v881, %v1140
    %v1151 = vadd.f32 %v882, %v1123
    %v1152 = vadd.f32 %v883, %v1142
    %s1153 = scalar_lea.vmem %s6, 32
    %v1154 = vld [vmem:[%s1153] sm:$0xff]
    %v1155 = vld [vmem:[%s1153 + $0x8] sm:$0xff]
    %1157 = vset.pattern.permute.xlu0 0
    %1158 = vperm.xlu0 %1157, %v1154
    %v1159 = vpop.permute.xlu0 %1158
    %1162 = vset.pattern.permute.xlu0 0
    %1163 = vperm.xlu0 %1162, %v1155
    %v1164 = vpop.permute.xlu0 %1163
    %v1166 = vadd.f32 %v1126, %v1159
    %v1167 = vadd.f32 %v1145, %v1159
    %v1168 = vadd.f32 %v1128, %v1164
    %v1169 = vadd.f32 %v1147, %v1164
    %v1170 = vadd.f32 %v1166, %v901
    %v1171 = vadd.f32 %v1167, %v902
    %v1172 = vadd.f32 %v1168, %v903
    %v1173 = vadd.f32 %v1169, %v904
    %v1174 = vpack.c.bf16 %v1171, %v1170
    %v1175 = vpack.c.bf16 %v1173, %v1172
    %1176 = vrot.lane.b32.xlu0 %v1170, 2
    %v1177 = vpop.permute.xlu0 %1176
    %1178 = vrot.lane.b32.xlu0 %v1172, 2
    %v1179 = vpop.permute.xlu0 %1178
    %1180 = vrot.lane.b32.xlu0 %v1171, 2
    %v1181 = vpop.permute.xlu0 %1180
    %1182 = vrot.lane.b32.xlu0 %v1173, 2
    %v1183 = vpop.permute.xlu0 %1182
    %v1184 = vsel %vm645, %v1177, %v1181
    %v1185 = vsel %vm645, %v1179, %v1183
    %v1186 = vsel %vm645, %v1181, %v1177
    %v1187 = vsel %vm645, %v1183, %v1179
    %v1188 = vsel %vm364, %v1186, 0.0
    %v1189 = vsel %vm365, %v1184, 0.0
    %v1190 = vsel %vm364, %v1187, 0.0
    %v1191 = vsel %vm365, %v1185, 0.0
    %v1192 = vpack.c.bf16 %v1189, %v1188
    %v1193 = vpack.c.bf16 %v1191, %v1190
    %v1196 = vunpack.c.l.b16 %v1192
    %v1197 = vunpack.c.h.b16 %v1192
    %v1198 = vunpack.c.l.b16 %v1193
    %v1199 = vunpack.c.h.b16 %v1193
    %v1200 = vpack.c.b16 %v1198, %v1196
    %v1201 = vpack.c.b16 %v1199, %v1197
    %v1206 = vunpack.c.l.b16 %v1174
    %v1207 = vunpack.c.h.b16 %v1174
    %v1208 = vunpack.c.l.b16 %v1175
    %v1209 = vunpack.c.h.b16 %v1175
    %v1210 = vpack.c.b16 %v1208, %v1206
    %v1211 = vpack.c.b16 %v1209, %v1207
    %s1214 = scalar_lea.vmem %s2, 48
    %v1215 = vld [vmem:[%s1214] sm:$0xf]
    %v1216 = vld [vmem:[%s1214 + $0x4] sm:$0xf]
    %v1217 = vld [vmem:[%s1214 + $0x8] sm:$0xf]
    %v1218 = vld [vmem:[%s1214 + $0xc] sm:$0xf]
    %v1223 = vunpack.c.l.b16 %v1215
    %v1224 = vunpack.c.l.b16 %v1216
    %v1225 = vunpack.c.l.b16 %v1217
    %v1226 = vunpack.c.l.b16 %v1218
    %v1227 = vpack.c.b16 %v1224, %v1223
    %v1228 = vpack.c.b16 %v1226, %v1225
    %v1230 = vsel %vm421, %v1227, 0
    %v1233 = vsel %vm421, %v1228, 0
    %1235 = vmatpush.bf16.msra.mxu0 0
    %1236 = vmatpush.bf16.msra.mxu0 0
    %1237 = vmatpush.bf16.msra.mxu0 0
    %1238 = vmatpush.bf16.msra.mxu0 0
    %1239 = vmatpush.bf16.msra.mxu0 0
    %1240 = vmatpush.bf16.msra.mxu0 0
    %1241 = vmatpush.bf16.msra.mxu0 %v1210
    %1242 = vmatpush.bf16.msra.mxu0 %v1200
    %1243 = vmatmul.bf16.gmra.mxu0 %v1230
    %v1244 = vpop.f32.mrf.mxu0
    %v1245 = vadd.f32 %v277, %v1244
    %v1246 = vpop.f32.mrf.mxu0
    %v1247 = vadd.f32 %v279, %v1246
    %1248 = vmatmul.bf16.gmra.mxu0 %v1233
    %v1249 = vpop.f32.mrf.mxu0
    %v1250 = vadd.f32 %v282, %v1249
    %v1251 = vpop.f32.mrf.mxu0
    %v1252 = vadd.f32 %v284, %v1251
    %1253 = vdwg.mxu0
    %1254 = vmatpush.bf16.msra.mxu0 0
    %1255 = vmatpush.bf16.msra.mxu0 0
    %1256 = vmatpush.bf16.msra.mxu0 0
    %1257 = vmatpush.bf16.msra.mxu0 0
    %1258 = vmatpush.bf16.msra.mxu0 0
    %1259 = vmatpush.bf16.msra.mxu0 0
    %1260 = vmatpush.bf16.msra.mxu0 %v1211
    %1261 = vmatpush.bf16.msra.mxu0 %v1201
    %1262 = vmatmul.bf16.gmra.mxu0 %v1230
    %v1263 = vpop.f32.mrf.mxu0
    %v1264 = vadd.f32 %v326, %v1263
    %v1265 = vpop.f32.mrf.mxu0
    %v1266 = vadd.f32 %v328, %v1265
    %1267 = vmatmul.bf16.gmra.mxu0 %v1233
    %v1268 = vpop.f32.mrf.mxu0
    %v1269 = vadd.f32 %v331, %v1268
    %v1270 = vpop.f32.mrf.mxu0
    %v1271 = vadd.f32 %v333, %v1270
    %1272 = vdwg.mxu0
    %v1273 = vtanh.pop %v1245
    %v1274 = vtanh.pop %v1264
    %v1275 = vtanh.pop %v1247
    %v1276 = vtanh.pop %v1266
    %v1277 = vxor.u32 %v1250, 2147483648
    %v1278 = vxor.u32 %v1269, 2147483648
    %v1279 = vxor.u32 %v1252, 2147483648
    %v1280 = vxor.u32 %v1271, 2147483648
    %v1281 = vmul.f32 %v1277, 1.442695
    %v1282 = vpow.pop %v1281
    %v1283 = vmul.f32 %v1278, 1.442695
    %v1284 = vpow.pop %v1283
    %v1285 = vmul.f32 %v1279, 1.442695
    %v1286 = vpow.pop %v1285
    %v1287 = vmul.f32 %v1280, 1.442695
    %v1288 = vpow.pop %v1287
    %v1289 = vadd.f32 %v1282, 1.0
    %v1290 = vadd.f32 %v1284, 1.0
    %v1291 = vadd.f32 %v1286, 1.0
    %v1292 = vadd.f32 %v1288, 1.0
    %v1293 = vrcp.pop %v1289
    %v1294 = vmul.f32 %v1289, %v1293
    %v1295 = vsub.f32 1.0, %v1294
    %v1296 = vmul.f32 %v1293, %v1295
    %v1297 = vadd.f32 %v1293, %v1296
    %vm1298 = vweird.f32 %v1289
    %vm1299 = vweird.f32 %v1293
    %vm1300 = vmor %vm1298, %vm1299
    %v1301 = vsel %vm1300, %v1293, %v1297
    %v1302 = vand.u32 2147483647, %v1289
    %vm1303 = vcmp.eq.f32.partialorder %v1302, 8.507059e+37
    %v1304 = vand.u32 %v1289, 2147483648
    %v1305 = vor.u32 1.1754944e-38, %v1304
    %v1306 = vsel %vm1303, %v1305, %v1301
    %v1307 = vmul.f32 1.0, %v1306
    %v1308 = vrcp.pop %v1290
    %v1309 = vmul.f32 %v1290, %v1308
    %v1310 = vsub.f32 1.0, %v1309
    %v1311 = vmul.f32 %v1308, %v1310
    %v1312 = vadd.f32 %v1308, %v1311
    %vm1313 = vweird.f32 %v1290
    %vm1314 = vweird.f32 %v1308
    %vm1315 = vmor %vm1313, %vm1314
    %v1316 = vsel %vm1315, %v1308, %v1312
    %v1317 = vand.u32 2147483647, %v1290
    %vm1318 = vcmp.eq.f32.partialorder %v1317, 8.507059e+37
    %v1319 = vand.u32 %v1290, 2147483648
    %v1320 = vor.u32 1.1754944e-38, %v1319
    %v1321 = vsel %vm1318, %v1320, %v1316
    %v1322 = vmul.f32 1.0, %v1321
    %v1323 = vrcp.pop %v1291
    %v1324 = vmul.f32 %v1291, %v1323
    %v1325 = vsub.f32 1.0, %v1324
    %v1326 = vmul.f32 %v1323, %v1325
    %v1327 = vadd.f32 %v1323, %v1326
    %vm1328 = vweird.f32 %v1291
    %vm1329 = vweird.f32 %v1323
    %vm1330 = vmor %vm1328, %vm1329
    %v1331 = vsel %vm1330, %v1323, %v1327
    %v1332 = vand.u32 2147483647, %v1291
    %vm1333 = vcmp.eq.f32.partialorder %v1332, 8.507059e+37
    %v1334 = vand.u32 %v1291, 2147483648
    %v1335 = vor.u32 1.1754944e-38, %v1334
    %v1336 = vsel %vm1333, %v1335, %v1331
    %v1337 = vmul.f32 1.0, %v1336
    %v1338 = vrcp.pop %v1292
    %v1339 = vmul.f32 %v1292, %v1338
    %v1340 = vsub.f32 1.0, %v1339
    %v1341 = vmul.f32 %v1338, %v1340
    %v1342 = vadd.f32 %v1338, %v1341
    %vm1343 = vweird.f32 %v1292
    %vm1344 = vweird.f32 %v1338
    %vm1345 = vmor %vm1343, %vm1344
    %v1346 = vsel %vm1345, %v1338, %v1342
    %v1347 = vand.u32 2147483647, %v1292
    %vm1348 = vcmp.eq.f32.partialorder %v1347, 8.507059e+37
    %v1349 = vand.u32 %v1292, 2147483648
    %v1350 = vor.u32 1.1754944e-38, %v1349
    %v1351 = vsel %vm1348, %v1350, %v1346
    %v1352 = vmul.f32 1.0, %v1351
    %v1353 = vmul.f32 %v1273, %v1307
    %v1354 = vmul.f32 %v1274, %v1322
    %v1355 = vmul.f32 %v1275, %v1337
    %v1356 = vmul.f32 %v1276, %v1352
    %v1357 = vpack.c.bf16 %v1355, %v1353
    %v1358 = vpack.c.bf16 %v1356, %v1354
    %s1359 = scalar_lea.vmem %s5, 48
    %v1360 = vld [vmem:[%s1359] sm:$0xf]
    %v1361 = vld [vmem:[%s1359 + $0x4] sm:$0xf]
    %v1362 = vld [vmem:[%s1359 + $0x8] sm:$0xf]
    %v1363 = vld [vmem:[%s1359 + $0xc] sm:$0xf]
    %v1368 = vunpack.c.l.b16 %v1360
    %v1369 = vunpack.c.l.b16 %v1361
    %v1370 = vunpack.c.l.b16 %v1362
    %v1371 = vunpack.c.l.b16 %v1363
    %v1372 = vpack.c.b16 %v1369, %v1368
    %v1373 = vpack.c.b16 %v1371, %v1370
    %v1375 = vsel %vm566, %v1372, 0
    %v1378 = vsel %vm566, %v1373, 0
    %1380 = vmatpush.bf16.msra.mxu0 0
    %1381 = vmatpush.bf16.msra.mxu0 0
    %1382 = vmatpush.bf16.msra.mxu0 0
    %1383 = vmatpush.bf16.msra.mxu0 0
    %1384 = vmatpush.bf16.msra.mxu0 0
    %1385 = vmatpush.bf16.msra.mxu0 0
    %1386 = vmatpush.bf16.msra.mxu0 0
    %1387 = vmatpush.bf16.msra.mxu0 %v1357
    %1388 = vmatmul.bf16.gmra.mxu0 %v1375
    %v1389 = vpop.f32.mrf.mxu0
    %v1390 = vadd.f32 0.0, %v1389
    %v1391 = vpop.f32.mrf.mxu0
    %v1392 = vadd.f32 0.0, %v1391
    %1393 = vmatmul.bf16.gmra.mxu0 %v1378
    %v1394 = vpop.f32.mrf.mxu0
    %v1395 = vpop.f32.mrf.mxu0
    %1396 = vdwg.mxu0
    %1397 = vmatpush.bf16.msra.mxu0 0
    %1398 = vmatpush.bf16.msra.mxu0 0
    %1399 = vmatpush.bf16.msra.mxu0 0
    %1400 = vmatpush.bf16.msra.mxu0 0
    %1401 = vmatpush.bf16.msra.mxu0 0
    %1402 = vmatpush.bf16.msra.mxu0 0
    %1403 = vmatpush.bf16.msra.mxu0 0
    %1404 = vmatpush.bf16.msra.mxu0 %v1358
    %1405 = vmatmul.bf16.gmra.mxu0 %v1375
    %v1406 = vpop.f32.mrf.mxu0
    %v1407 = vadd.f32 0.0, %v1406
    %v1408 = vpop.f32.mrf.mxu0
    %v1409 = vadd.f32 0.0, %v1408
    %1410 = vmatmul.bf16.gmra.mxu0 %v1378
    %v1411 = vpop.f32.mrf.mxu0
    %v1412 = vpop.f32.mrf.mxu0
    %1413 = vdwg.mxu0
    %v1414 = vadd.f32 %v1149, %v1390
    %v1415 = vadd.f32 %v1150, %v1407
    %v1416 = vadd.f32 %v1151, %v1392
    %v1417 = vadd.f32 %v1152, %v1409
    %v1418 = vld [vmem:[%s7] sm:$0xff]
    %v1419 = vld [vmem:[%s7 + $0x8] sm:$0xff]
    %1421 = vset.pattern.permute.xlu0 0
    %1422 = vperm.xlu0 %1421, %v1418
    %v1423 = vpop.permute.xlu0 %1422
    %1426 = vset.pattern.permute.xlu0 0
    %1427 = vperm.xlu0 %1426, %v1419
    %v1428 = vpop.permute.xlu0 %1427
    %v1430 = vadd.f32 %v1414, %v1423
    %v1431 = vadd.f32 %v1415, %v1423
    %v1432 = vadd.f32 %v1416, %v1428
    %v1433 = vadd.f32 %v1417, %v1428
    %v1434 = vmax.f32 %v1430, 0.0
    %v1435 = vmax.f32 %v1431, 0.0
    %v1436 = vmax.f32 %v1432, 0.0
    %v1437 = vmax.f32 %v1433, 0.0
    %v1438 = vld [vmem:[%s8] sm:$0xf]
    %v1439 = vld [vmem:[%s8 + $0x4] sm:$0xf]
    %v1440 = vpack.c.bf16 %v1436, %v1434
    %v1441 = vpack.c.bf16 %v1437, %v1435
    %v1442 = vld [vmem:[%s9] sm:$0xff]
    %v1443 = vld [vmem:[%s9 + $0x8] sm:$0xff]
    %1445 = vset.pattern.permute.xlu0 0
    %1446 = vperm.xlu0 %1445, %v1442
    %v1447 = vpop.permute.xlu0 %1446
    %1450 = vset.pattern.permute.xlu0 0
    %1451 = vperm.xlu0 %1450, %v1443
    %v1452 = vpop.permute.xlu0 %1451
    %v1456 = vunpack.c.l.b16 %v1438
    %v1457 = vunpack.c.l.b16 %v1439
    %v1458 = vpack.c.b16 %v1457, %v1456
    %v1460 = vsel %vm566, %v1458, 0
    %1462 = vmatpush.bf16.msra.mxu0 0
    %1463 = vmatpush.bf16.msra.mxu0 0
    %1464 = vmatpush.bf16.msra.mxu0 0
    %1465 = vmatpush.bf16.msra.mxu0 0
    %1466 = vmatpush.bf16.msra.mxu0 0
    %1467 = vmatpush.bf16.msra.mxu0 0
    %1468 = vmatpush.bf16.msra.mxu0 0
    %1469 = vmatpush.bf16.msra.mxu0 %v1440
    %1470 = vmatmul.bf16.gmra.mxu0 %v1460
    %v1471 = vpop.f32.mrf.mxu0
    %v1472 = vadd.f32 %v1447, %v1471
    %v1473 = vpop.f32.mrf.mxu0
    %v1474 = vadd.f32 %v1452, %v1473
    %1475 = vdwg.mxu0
    %1476 = vmatpush.bf16.msra.mxu0 0
    %1477 = vmatpush.bf16.msra.mxu0 0
    %1478 = vmatpush.bf16.msra.mxu0 0
    %1479 = vmatpush.bf16.msra.mxu0 0
    %1480 = vmatpush.bf16.msra.mxu0 0
    %1481 = vmatpush.bf16.msra.mxu0 0
    %1482 = vmatpush.bf16.msra.mxu0 0
    %1483 = vmatpush.bf16.msra.mxu0 %v1441
    %1484 = vmatmul.bf16.gmra.mxu0 %v1460
    %v1485 = vpop.f32.mrf.mxu0
    %v1486 = vadd.f32 %v1447, %v1485
    %v1487 = vpop.f32.mrf.mxu0
    %v1488 = vadd.f32 %v1452, %v1487
    %1489 = vdwg.mxu0
    %v1490 = vmax.f32 %v1472, 0.0
    %v1491 = vmax.f32 %v1486, 0.0
    %v1492 = vmax.f32 %v1474, 0.0
    %v1493 = vmax.f32 %v1488, 0.0
    %v1494 = vld [vmem:[%s10] sm:$0xf]
    %v1495 = vld [vmem:[%s10 + $0x4] sm:$0xf]
    %v1496 = vld [vmem:[%s10 + $0x8] sm:$0xf]
    %v1497 = vld [vmem:[%s10 + $0xc] sm:$0xf]
    %v1498 = vpack.c.bf16 %v1492, %v1490
    %v1499 = vpack.c.bf16 %v1493, %v1491
    %v1500 = vld [vmem:[%s11] sm:$0xff]
    %v1501 = vld [vmem:[%s11 + $0x8] sm:$0xff]
    %v1502 = vld [vmem:[%s11 + $0x10] sm:$0xff]
    %v1503 = vld [vmem:[%s11 + $0x18] sm:$0xff]
    %1505 = vset.pattern.permute.xlu0 0
    %1506 = vperm.xlu0 %1505, %v1500
    %v1507 = vpop.permute.xlu0 %1506
    %1510 = vset.pattern.permute.xlu0 0
    %1511 = vperm.xlu0 %1510, %v1501
    %v1512 = vpop.permute.xlu0 %1511
    %1515 = vset.pattern.permute.xlu0 0
    %1516 = vperm.xlu0 %1515, %v1502
    %v1517 = vpop.permute.xlu0 %1516
    %1520 = vset.pattern.permute.xlu0 0
    %1521 = vperm.xlu0 %1520, %v1503
    %v1522 = vpop.permute.xlu0 %1521
    %v1528 = vunpack.c.l.b16 %v1494
    %v1529 = vunpack.c.l.b16 %v1495
    %v1530 = vunpack.c.l.b16 %v1496
    %v1531 = vunpack.c.l.b16 %v1497
    %v1532 = vpack.c.b16 %v1529, %v1528
    %v1533 = vpack.c.b16 %v1531, %v1530
    %v1535 = vsel %vm566, %v1532, 0
    %v1538 = vsel %vm566, %v1533, 0
    %1540 = vmatpush.bf16.msra.mxu0 0
    %1541 = vmatpush.bf16.msra.mxu0 0
    %1542 = vmatpush.bf16.msra.mxu0 0
    %1543 = vmatpush.bf16.msra.mxu0 0
    %1544 = vmatpush.bf16.msra.mxu0 0
    %1545 = vmatpush.bf16.msra.mxu0 0
    %1546 = vmatpush.bf16.msra.mxu0 0
    %1547 = vmatpush.bf16.msra.mxu0 %v1498
    %1548 = vmatmul.bf16.gmra.mxu0 %v1535
    %v1549 = vpop.f32.mrf.mxu0
    %v1550 = vadd.f32 %v1507, %v1549
    %v1551 = vpop.f32.mrf.mxu0
    %v1552 = vadd.f32 %v1512, %v1551
    %1553 = vmatmul.bf16.gmra.mxu0 %v1538
    %v1554 = vpop.f32.mrf.mxu0
    %v1555 = vadd.f32 %v1517, %v1554
    %v1556 = vpop.f32.mrf.mxu0
    %v1557 = vadd.f32 %v1522, %v1556
    %1558 = vdwg.mxu0
    %1559 = vmatpush.bf16.msra.mxu0 0
    %1560 = vmatpush.bf16.msra.mxu0 0
    %1561 = vmatpush.bf16.msra.mxu0 0
    %1562 = vmatpush.bf16.msra.mxu0 0
    %1563 = vmatpush.bf16.msra.mxu0 0
    %1564 = vmatpush.bf16.msra.mxu0 0
    %1565 = vmatpush.bf16.msra.mxu0 0
    %1566 = vmatpush.bf16.msra.mxu0 %v1499
    %1567 = vmatmul.bf16.gmra.mxu0 %v1535
    %v1568 = vpop.f32.mrf.mxu0
    %v1569 = vadd.f32 %v1507, %v1568
    %v1570 = vpop.f32.mrf.mxu0
    %v1571 = vadd.f32 %v1512, %v1570
    %1572 = vmatmul.bf16.gmra.mxu0 %v1538
    %v1573 = vpop.f32.mrf.mxu0
    %v1574 = vadd.f32 %v1517, %v1573
    %v1575 = vpop.f32.mrf.mxu0
    %v1576 = vadd.f32 %v1522, %v1575
    %1577 = vdwg.mxu0
    %1578 = vst [vmem:[#allocation2] sm:$0xff] %v1550
    %1579 = vst [vmem:[#allocation2 + $0x8] sm:$0xff] %v1569
    %1580 = vst [vmem:[#allocation2 + $0x10] sm:$0xff] %v1552
    %1581 = vst [vmem:[#allocation2 + $0x18] sm:$0xff] %v1571
    %1582 = vst [vmem:[#allocation2 + $0x20] sm:$0xff] %v1555
    %1583 = vst [vmem:[#allocation2 + $0x28] sm:$0xff] %v1574
    %1584 = vst [vmem:[#allocation2 + $0x30] sm:$0xff] %v1557
    %1585 = vst [vmem:[#allocation2 + $0x38] sm:$0xff] %v1576
    // Predicated region
    $region50: #{tpu_custom_call.1} parent=1 // pred_check
      _
    $region51: #{tpu_custom_call.1} parent=1 // pred_check_branch
      %1587 = sbr.rel (0) target = $region53
    $region52: #{tpu_custom_call.1} parent=1 // pred_region
      %1589 = vsyncadd [#allocation3], 0
      %s1590 = sshll.u32 [#allocation2], 4
      %s1591 = int_to_ptr.vmem [resolvable:$true] %s1590
      %s1592 = sshll.u32 %s12, 4
      %s1593 = int_to_ptr.hbm [resolvable:$true] %s1592
      %1598 = dma.vmem_to_hbm [thread:$0]  %s1591, 1024, %s1593, [#allocation3], 256, 256, 16
    $region53: #{tpu_custom_call.1} parent=1 // pred_fallthru
      _
    // Predicated region
    $region54: #{tpu_custom_call.1} parent=1 // pred_check
      _
    $region55: #{tpu_custom_call.1} parent=1 // pred_check_branch
      %1600 = sbr.rel (0) target = $region57
    $region56: #{tpu_custom_call.1} parent=1 // pred_region
      %1602 = dma.done [#allocation3], 1024
    $region57: #{tpu_custom_call.1} parent=1 // pred_fallthru
      _
    %1603 = vsyncpa [#allocation3], 1

</llo_original>
